<compile_context>
chip_gen: v7x
topology: tpu7x:2x2x1
jax: 0.10.0
libtpu: 0.0.40
codegen_flags: <defaults>
</compile_context>

<pallas_src>
import functools
import math

import jax
import jax.numpy as jnp
from jax.experimental import pallas as pl
from jax.experimental.pallas import tpu as pltpu


# ---------------------------------------------------------------------------
# Generation-aware configuration
# ---------------------------------------------------------------------------
def _tpu_generation():
    try:
        kind = jax.devices()[0].device_kind.lower()
    except Exception:
        kind = ""
    if "v7" in kind:
        return "v7x"
    if "v6" in kind:
        return "v6e"
    if "v5e" in kind or "v5 lite" in kind or "v5litepod" in kind:
        return "v5e"
    return "other"


# bf16_vpu: VPU is bf16-native -> layer-1 broadcast add/ReLU in bf16.
# min_h   : pad embed_dim up to this (MXU width: 128 on v5e, 256 on v6e/v7x).
# vmem    : scoped VMEM limit (v7x has only 64 MiB physical -> leave headroom).
# split2  : require >=2 grid tiles so both v7x TensorCores get work.
_GEN_CFG = {
    "v7x":   dict(bf16_vpu=True,  min_h=256, vmem=44 * 2**20,  split2=True),
    "v6e":   dict(bf16_vpu=True,  min_h=256, vmem=100 * 2**20, split2=False),
    "v5e":   dict(bf16_vpu=False, min_h=128, vmem=96 * 2**20,  split2=False),
    "other": dict(bf16_vpu=False, min_h=128, vmem=64 * 2**20,  split2=False),
}


def _round_up(a, m):
    return ((a + m - 1) // m) * m


# ---------------------------------------------------------------------------
# Kernel: one (ti, tj) tile of scores[i, j] = f([x_i, y_j])
# ---------------------------------------------------------------------------
def _make_concat_critic_kernel(n_hidden):
    def kernel(xa_ref, yb_ref, *rest):
        hid = rest[: 2 * n_hidden]              # (wh_0, bh_0, ..., wh_{n-1}, bh_{n-1})
        w_out_ref = rest[2 * n_hidden]          # (1, Hp)  f32
        b_out_ref = rest[2 * n_hidden + 1]      # (1, 1)   f32
        out_ref = rest[2 * n_hidden + 2]        # (ti, tj) f32

        # Layer 1 (split-concat trick; matmuls hoisted out of the kernel):
        # xa = x @ W1x + b1, yb = y @ W1y, so h1 = relu(xa_i + yb_j).
        xa = xa_ref[...]                        # (ti, Hp) bf16 (v6e/v7x) or f32 (v5e)
        yb = yb_ref[...]                        # (tj, Hp)
        h = jnp.maximum(xa[:, None, :] + yb[None, :, :], 0)   # (ti, tj, Hp)
        ti, tj, Hp = h.shape
        h = h.reshape(ti * tj, Hp)              # lane dim preserved
        if h.dtype != jnp.bfloat16:
            h = h.astype(jnp.bfloat16)          # single downcast before MXU work

        # Hidden layers: bf16 activations/weights, f32 accumulation,
        # fused bias-add + ReLU + downcast.
        for k in range(n_hidden):
            w = hid[2 * k][...]                 # (Hp, Hp) bf16
            b = hid[2 * k + 1][...]             # (1, Hp)  f32
            acc = jnp.dot(h, w, preferred_element_type=jnp.float32)
            h = jnp.maximum(acc + b, 0.0).astype(jnp.bfloat16)

        # Output layer (Hp -> 1): multiply + lane reduce in f32, written as a
        # lane-dense (ti, tj) tile (no (P, 1) relayout, no transpose).
        h = h.reshape(ti, tj, Hp).astype(jnp.float32)
        scores = jnp.sum(h * w_out_ref[...], axis=-1) + b_out_ref[...]
        out_ref[...] = scores.astype(out_ref.dtype)

    return kernel


# ---------------------------------------------------------------------------
# VMEM-budgeted tile selection
# ---------------------------------------------------------------------------
def _estimate_vmem_bytes(ti, tj, Hp, n_hidden, act_bytes):
    P = ti * tj
    # Weights/biases (double-buffered by the pipeline even though constant).
    weights = 2 * (n_hidden * (Hp * Hp * 2 + Hp * 4) + Hp * 4 + 4 * 1024)
    # xa/yb/out tiles, double-buffered.
    io = 2 * ((ti + tj) * Hp * act_bytes + ti * tj * 4)
    layer1 = P * Hp * (act_bytes + 2)           # broadcast-add result + bf16 copy
    hidden = P * Hp * (2 + 4 + 2)               # h_bf16 + f32 acc + next h_bf16
    final = P * Hp * (2 + 4)                    # h_bf16 + f32 product
    peak_act = max(layer1, final, hidden if n_hidden else 0)
    return weights + io + peak_act + (1 << 20)


def _choose_tiles(B, Hp, n_hidden, act_bytes, cfg):
    tj = 128                                    # lane-dense output tile -> unmasked vst
    Bj = _round_up(B, tj)                       # pad tiny batches to a full 128-lane tile
    row_align = 16 if act_bytes == 2 else 8     # bf16 packs 16 rows per vreg
    budget = int(cfg["vmem"] * 0.75)            # headroom vs. the scoped limit
    cands = (256, 128, 64, 32, 16) if row_align == 16 else (256, 128, 64, 32, 16, 8)
    ti = row_align
    for cand in cands:
        if _estimate_vmem_bytes(cand, tj, Hp, n_hidden, act_bytes) <= budget:
            ti = cand
            break
    ti = min(ti, _round_up(B, row_align))       # don't over-pad tiny batches
    Bi = _round_up(B, ti)
    if cfg["split2"] and (Bi // ti) * (Bj // tj) < 2:
        # v7x megacore: make sure both TensorCores get at least one tile.
        if ti > row_align:
            ti = max(row_align, (ti // 2) // row_align * row_align)
            Bi = _round_up(B, ti)
        if (Bi // ti) * (Bj // tj) < 2:
            Bi = 2 * ti
    return ti, tj, Bi, Bj


# ---------------------------------------------------------------------------
# Forward
# ---------------------------------------------------------------------------
@functools.partial(
    jax.jit,
    static_argnames=("x_dim", "Hp", "ti", "tj", "Bi", "Bj", "act_dtype", "vmem_limit"))
def _forward_jit(x, y, params, *, x_dim, Hp, ti, tj, Bi, Bj, act_dtype, vmem_limit):
    w1, b1, hidden, w_last, b_last = params
    H = w1.shape[1]
    n_hidden = len(hidden)
    B = x.shape[0]
    padH = Hp - H

    def pad_cols(a):
        return jnp.pad(a, ((0, 0), (0, padH))) if padH else a

    # Hoisted layer 1: computed once in f32 XLA matmuls (tiny), b1 folded into xa.
    xa = x.astype(jnp.float32) @ pad_cols(w1[:x_dim]) + pad_cols(b1)    # (B, Hp)
    yb = y.astype(jnp.float32) @ pad_cols(w1[x_dim:])                   # (B, Hp)
    xa = jnp.pad(xa, ((0, Bi - B), (0, 0))).astype(act_dtype)
    yb = jnp.pad(yb, ((0, Bj - B), (0, 0))).astype(act_dtype)

    # Kernel params: hidden weights bf16 (zero-padded to Hp), biases f32,
    # output weight f32 (used in a VPU lane reduce), all VMEM-resident.
    kparams = []
    for w, b in hidden:
        wp = jnp.pad(w, ((0, padH), (0, padH))) if padH else w
        kparams.append(wp.astype(jnp.bfloat16))
        kparams.append(pad_cols(b).astype(jnp.float32))
    kparams.append(pad_cols(w_last.reshape(1, -1)).astype(jnp.float32))
    kparams.append(b_last.reshape(1, 1).astype(jnp.float32))

    grid = (Bi // ti, Bj // tj)

    in_specs = [
        pl.BlockSpec((ti, Hp), lambda i, j: (i, 0)),     # xa rows for this tile
        pl.BlockSpec((tj, Hp), lambda i, j: (j, 0)),     # yb rows for this tile
    ]
    # Weights/biases: full arrays, constant index_map -> fetched once, VMEM-resident.
    in_specs += [pl.BlockSpec(p.shape, lambda i, j: (0, 0)) for p in kparams]
    out_specs = pl.BlockSpec((ti, tj), lambda i, j: (i, j))

    flops = int(Bi * Bj * (2 * n_hidden * Hp * Hp + 3 * Hp))
    bytes_accessed = int(xa.size * xa.dtype.itemsize * grid[1]
                         + yb.size * yb.dtype.itemsize * grid[0]
                         + sum(p.size * p.dtype.itemsize for p in kparams)
                         + Bi * Bj * 4)

    return pl.pallas_call(
        _make_concat_critic_kernel(n_hidden),
        grid=grid,
        in_specs=in_specs,
        out_specs=out_specs,
        out_shape=jax.ShapeDtypeStruct((Bi, Bj), jnp.float32),
        compiler_params=pltpu.CompilerParams(
            dimension_semantics=("parallel", "parallel"),
            vmem_limit_bytes=vmem_limit),
        cost_estimate=pl.CostEstimate(
            flops=flops, transcendentals=0, bytes_accessed=bytes_accessed),
    )(xa, yb, *kparams)


def concat_critic_forward(x, y, params):
    gen = _tpu_generation()
    cfg = _GEN_CFG[gen]
    B, x_dim = x.shape
    w1, _, hidden, _, _ = params
    H = w1.shape[1]
    n_hidden = len(hidden)
    Hp = max(_round_up(H, 128), cfg["min_h"])
    act_dtype = jnp.bfloat16 if cfg["bf16_vpu"] else jnp.float32
    act_bytes = 2 if cfg["bf16_vpu"] else 4
    ti, tj, Bi, Bj = _choose_tiles(B, Hp, n_hidden, act_bytes, cfg)
    out = _forward_jit(x, y, params, x_dim=x_dim, Hp=Hp, ti=ti, tj=tj, Bi=Bi, Bj=Bj,
                       act_dtype=act_dtype, vmem_limit=int(cfg["vmem"]))
    return out[:B, :B]


# ---------------------------------------------------------------------------
# Parameters (PyTorch-style Linear init; weights stored as (in, out))
# ---------------------------------------------------------------------------
def init_concat_critic_params(key, x_dim, y_dim, embed_dim, n_layers):
    def linear(k, fan_in, fan_out):
        kw, kb = jax.random.split(k)
        bound = 1.0 / math.sqrt(float(fan_in))
        w = jax.random.uniform(kw, (fan_in, fan_out), jnp.float32, -bound, bound)
        b = jax.random.uniform(kb, (1, fan_out), jnp.float32, -bound, bound)
        return w, b

    keys = jax.random.split(key, n_layers + 2)
    w1, b1 = linear(keys[0], x_dim + y_dim, embed_dim)
    hidden = tuple(linear(keys[1 + k], embed_dim, embed_dim) for k in range(n_layers))
    w_last, b_last = linear(keys[n_layers + 1], embed_dim, 1)
    return (w1, b1, hidden, w_last, b_last)


# ---------------------------------------------------------------------------
# Pure-JAX reference (mirrors the PyTorch forward exactly, f32)
# ---------------------------------------------------------------------------
def concat_critic_reference(x, y, params):
    w1, b1, hidden, w_last, b_last = params
    B = x.shape[0]
    x_tiled = jnp.tile(x[None, :, :], (B, 1, 1))          # [i, j] = x[j]
    y_tiled = jnp.tile(y[:, None, :], (1, B, 1))          # [i, j] = y[i]
    xy = jnp.concatenate([x_tiled, y_tiled], axis=2).reshape(B * B, -1)
    h = jnp.maximum(xy @ w1 + b1, 0.0)
    for w, b in hidden:
        h = jnp.maximum(h @ w + b, 0.0)
    s = h @ w_last + b_last                               # (B*B, 1)
    return s.reshape(B, B).T                              # out[i, j] = f([x_i, y_j])


# ---------------------------------------------------------------------------
if __name__ == "__main__":
    x_dim, y_dim = 16, 8
    embed_dim, n_layers = 32, 1
    batch = 8

    key = jax.random.PRNGKey(0)
    kx, ky, kp = jax.random.split(key, 3)
    x = jax.random.normal(kx, (batch, x_dim), jnp.float32)
    y = jax.random.normal(ky, (batch, y_dim), jnp.float32)

    params = init_concat_critic_params(kp, x_dim, y_dim, embed_dim, n_layers)

    scores = concat_critic_forward(x, y, params)
    jax.block_until_ready(scores)

    ref = concat_critic_reference(x, y, params)
    assert scores.shape == (batch, batch), scores.shape
    # bf16 matmuls / activations (f32 accumulation) vs f32 reference.
    assert jnp.allclose(scores, ref, atol=4e-2, rtol=4e-2), (
        "mismatch vs pure-JAX reference")

    print("KERNEL_OK")
</pallas_src>

<mosaic_0001>
module attributes {stable_mosaic.version = 11 : i64} {
  func.func @kernel(%arg0: i32, %arg1: i32, %arg2: memref<8x128xf32, #tpu.memory_space<vmem>>, %arg3: memref<128x128xf32, #tpu.memory_space<vmem>>, %arg4: memref<128x128xbf16, #tpu.memory_space<vmem>>, %arg5: memref<1x128xf32, #tpu.memory_space<vmem>>, %arg6: memref<1x128xf32, #tpu.memory_space<vmem>>, %arg7: memref<1x1xf32, #tpu.memory_space<vmem>>, %arg8: memref<8x128xf32, #tpu.memory_space<vmem>>) attributes {dimension_semantics = [#tpu.dimension_semantics<parallel>, #tpu.dimension_semantics<parallel>], iteration_bounds = array<i64: 1, 1>, scalar_prefetch = 0 : i64, scratch_operands = 0 : i64, tpu.core_type = #tpu.core_type<tc>, window_params = [{transform_indices = @transform_0, window_bounds = array<i64: 8, 128>}, {transform_indices = @transform_1, window_bounds = array<i64: 128, 128>}, {pipeline_mode = #tpu.pipeline_mode<synchronous>, transform_indices = @transform_2, window_bounds = array<i64: 128, 128>}, {pipeline_mode = #tpu.pipeline_mode<synchronous>, transform_indices = @transform_3, window_bounds = array<i64: 1, 128>}, {pipeline_mode = #tpu.pipeline_mode<synchronous>, transform_indices = @transform_4, window_bounds = array<i64: 1, 128>}, {pipeline_mode = #tpu.pipeline_mode<synchronous>, transform_indices = @transform_5, window_bounds = array<i64: 1, 1>}, {transform_indices = @transform_6, window_bounds = array<i64: 8, 128>}]} {
    %c0 = arith.constant 0 : index
    %c0_0 = arith.constant 0 : index
    %0 = vector.load %arg2[%c0, %c0_0] : memref<8x128xf32, #tpu.memory_space<vmem>>, vector<8x128xf32>
    %c0_1 = arith.constant 0 : index
    %c0_2 = arith.constant 0 : index
    %1 = vector.load %arg3[%c0_1, %c0_2] : memref<128x128xf32, #tpu.memory_space<vmem>>, vector<128x128xf32>
    %2 = vector.shape_cast %0 : vector<8x128xf32> to vector<8x1x128xf32>
    %3 = vector.shape_cast %1 : vector<128x128xf32> to vector<1x128x128xf32>
    %4 = vector.broadcast %2 : vector<8x1x128xf32> to vector<8x128x128xf32>
    %5 = vector.broadcast %3 : vector<1x128x128xf32> to vector<8x128x128xf32>
    %6 = arith.addf %4, %5 : vector<8x128x128xf32>
    %cst = arith.constant 0.000000e+00 : f32
    %7 = vector.broadcast %cst : f32 to vector<8x128x128xf32>
    %8 = arith.maximumf %6, %7 : vector<8x128x128xf32>
    %9 = vector.shape_cast %8 : vector<8x128x128xf32> to vector<1024x128xf32>
    %10 = arith.truncf %9 : vector<1024x128xf32> to vector<1024x128xbf16>
    %c0_3 = arith.constant 0 : index
    %c0_4 = arith.constant 0 : index
    %11 = vector.load %arg4[%c0_3, %c0_4] : memref<128x128xbf16, #tpu.memory_space<vmem>>, vector<128x128xbf16>
    %c0_5 = arith.constant 0 : index
    %c0_6 = arith.constant 0 : index
    %12 = vector.load %arg5[%c0_5, %c0_6] : memref<1x128xf32, #tpu.memory_space<vmem>>, vector<1x128xf32>
    %cst_7 = arith.constant dense<0.000000e+00> : vector<1024x128xf32>
    %13 = tpu.matmul %10, %11, %cst_7 {dimension_numbers = #tpu.dot_dimension_numbers<[1], [0], [0], [1], [0, 0, 1, 1], [], []>} : vector<1024x128xbf16>, vector<128x128xbf16>, vector<1024x128xf32> -> vector<1024x128xf32>
    %14 = vector.broadcast %12 : vector<1x128xf32> to vector<1024x128xf32>
    %15 = arith.addf %13, %14 : vector<1024x128xf32>
    %cst_8 = arith.constant 0.000000e+00 : f32
    %16 = vector.broadcast %cst_8 : f32 to vector<1024x128xf32>
    %17 = arith.maximumf %15, %16 : vector<1024x128xf32>
    %18 = arith.truncf %17 : vector<1024x128xf32> to vector<1024x128xbf16>
    %19 = vector.shape_cast %18 : vector<1024x128xbf16> to vector<8x128x128xbf16>
    %20 = arith.extf %19 : vector<8x128x128xbf16> to vector<8x128x128xf32>
    %c0_9 = arith.constant 0 : index
    %c0_10 = arith.constant 0 : index
    %21 = vector.load %arg6[%c0_9, %c0_10] : memref<1x128xf32, #tpu.memory_space<vmem>>, vector<1x128xf32>
    %22 = vector.shape_cast %21 : vector<1x128xf32> to vector<1x1x128xf32>
    %23 = vector.broadcast %22 : vector<1x1x128xf32> to vector<8x128x128xf32>
    %24 = arith.mulf %20, %23 : vector<8x128x128xf32>
    %cst_11 = arith.constant dense<0.000000e+00> : vector<8x128xf32>
    %25 = vector.multi_reduction <add>, %24, %cst_11 [2] : vector<8x128x128xf32> to vector<8x128xf32>
    %c0_12 = arith.constant 0 : index
    %c0_13 = arith.constant 0 : index
    %26 = vector.load %arg7[%c0_12, %c0_13] : memref<1x1xf32, #tpu.memory_space<vmem>>, vector<1x1xf32>
    %27 = vector.broadcast %26 : vector<1x1xf32> to vector<8x128xf32>
    %28 = arith.addf %25, %27 : vector<8x128xf32>
    %c0_14 = arith.constant 0 : index
    %c0_15 = arith.constant 0 : index
    %29 = vector.load %arg8[%c0_14, %c0_15] : memref<8x128xf32, #tpu.memory_space<vmem>>, vector<8x128xf32>
    tpu.vector_store %arg8[%c0_14, %c0_15], %28 {strides = array<i32>} : memref<8x128xf32, #tpu.memory_space<vmem>>, vector<8x128xf32>,
    return
  }
  func.func @transform_0(%arg0: i32, %arg1: i32) -> (i32, i32) {
    %c0_i32 = arith.constant 0 : i32
    %c0_i32_0 = arith.constant 0 : i32
    return %arg0, %c0_i32 : i32, i32
  }
  func.func @transform_1(%arg0: i32, %arg1: i32) -> (i32, i32) {
    %c0_i32 = arith.constant 0 : i32
    %c0_i32_0 = arith.constant 0 : i32
    return %arg1, %c0_i32 : i32, i32
  }
  func.func @transform_2(%arg0: i32, %arg1: i32) -> (i32, i32) {
    %c0_i32 = arith.constant 0 : i32
    %c0_i32_0 = arith.constant 0 : i32
    %c0_i32_1 = arith.constant 0 : i32
    return %c0_i32, %c0_i32_0 : i32, i32
  }
  func.func @transform_3(%arg0: i32, %arg1: i32) -> (i32, i32) {
    %c0_i32 = arith.constant 0 : i32
    %c0_i32_0 = arith.constant 0 : i32
    %c0_i32_1 = arith.constant 0 : i32
    return %c0_i32, %c0_i32_0 : i32, i32
  }
  func.func @transform_4(%arg0: i32, %arg1: i32) -> (i32, i32) {
    %c0_i32 = arith.constant 0 : i32
    %c0_i32_0 = arith.constant 0 : i32
    %c0_i32_1 = arith.constant 0 : i32
    return %c0_i32, %c0_i32_0 : i32, i32
  }
  func.func @transform_5(%arg0: i32, %arg1: i32) -> (i32, i32) {
    %c0_i32 = arith.constant 0 : i32
    %c0_i32_0 = arith.constant 0 : i32
    %c0_i32_1 = arith.constant 0 : i32
    return %c0_i32, %c0_i32_0 : i32, i32
  }
  func.func @transform_6(%arg0: i32, %arg1: i32) -> (i32, i32) {
    %c0_i32 = arith.constant 0 : i32
    return %arg0, %arg1 : i32, i32
  }
}

</mosaic_0001>

<llo_original>
// kernel: _forward_jit.1
$region0: #{_forward_jit.1}
  #allocation0 [shape = 'u32[]', space=smem, size = 0x4, offset = 0x4, fixed_abs, tag = 'smem constant byte address 0x4 - core index']
  #allocation1 [shape = 'u32[144,128]{1,0:T(1,128)}', space=vmem, size = 0x12000, scoped, tag = 'internal scratch']
  #allocation2 [shape = 'f32[1,1]{1,0:T(1,128)S(1)}', space=vmem, size = 0x200, scoped, tag = 'scoped memory for _forward_jit.1']
  %s0 = inlined_call_operand.hbm [shape: f32[8,128], index: 0, kind: input, shape index: {}]
  %s1 = inlined_call_operand.hbm [shape: f32[128,128], index: 1, kind: input, shape index: {}]
  %s2 = inlined_call_operand.hbm [shape: bf16[128,128], index: 2, kind: input, shape index: {}]
  %s3 = inlined_call_operand.hbm [shape: f32[1,128], index: 3, kind: input, shape index: {}]
  %s4 = inlined_call_operand.hbm [shape: f32[1,128], index: 4, kind: input, shape index: {}]
  %s5 = inlined_call_operand.<no memory space> [shape: f32[1,1], index: 5, kind: input, shape index: {}]
  %s6 = inlined_call_operand.hbm [shape: f32[8,128], index: 6, kind: output, shape index: {}]
  %s7 = sld [smem:[#allocation0]]
  $region54: #{_forward_jit.1} parent=0
    _
  %s9 = ssub.s32 1, %s7
  %s10 = scalar_select 0, %s9, %s7
  %v11 = vstv %s5
  %12 = vst [vmem:[#allocation2] sm:$0x1] %v11
  $region1: #{_forward_jit.1} parent=0
    #allocation3 [shape = 'u8[4096]{0}', space=vmem, size = 0x1000, scoped, tag = 'input window, operand 0, single buffered']
    #allocation4 [shape = 's32[1]{0}', space=sflag, size = 0x4, scoped, tag = 'scoped memory for _forward_jit.1']
    #allocation5 [shape = 's32[1]{0}', space=sflag, size = 0x4, scoped, tag = 'scoped memory for _forward_jit.1']
    #allocation6 [shape = 'u8[65536]{0}', space=vmem, size = 0x10000, scoped, tag = 'input window, operand 1, single buffered']
    #allocation7 [shape = 's32[1]{0}', space=sflag, size = 0x4, scoped, tag = 'scoped memory for _forward_jit.1']
    #allocation8 [shape = 'u8[32768]{0}', space=vmem, size = 0x8000, scoped, tag = 'input window, operand 2, single buffered']
    #allocation9 [shape = 'u8[512]{0}', space=vmem, size = 0x400, scoped, tag = 'input window, operand 3, single buffered']
    #allocation10 [shape = 's32[1]{0}', space=sflag, size = 0x4, scoped, tag = 'scoped memory for _forward_jit.1']
    #allocation11 [shape = 'u8[512]{0}', space=vmem, size = 0x400, scoped, tag = 'input window, operand 4, single buffered']
    #allocation12 [shape = 'u8[4096]{0}', space=vmem, size = 0x1000, scoped, tag = 'output window, operand 0, single buffered']
    %13 = vsyncpa [#allocation4], 0
    %14 = vsyncpa [#allocation7], 0
    %15 = vsyncpa [#allocation10], 0
    %16 = vsyncpa [#allocation5], 0
    // Predicated region
    $region2: #{_forward_jit.1} parent=1 // pred_check
      _
    $region3: #{_forward_jit.1} parent=1 // pred_check_branch
      %18 = sbr.rel (0) target = $region5
    $region4: #{_forward_jit.1} parent=1 // pred_region
      %s20 = ssub.s32 128, 128
      %21 = vsyncadd [#allocation4], %s20
      %s23 = sshll.u32 [#allocation3], 4
      %s24 = int_to_ptr.vmem [resolvable:$true] %s23
      %26 = dma.hbm_to_vmem [thread:$0]  %s0, 128, %s24, [#allocation4]
    $region5: #{_forward_jit.1} parent=1 // pred_fallthru
      _
    // Predicated region
    $region6: #{_forward_jit.1} parent=1 // pred_check
      _
    $region7: #{_forward_jit.1} parent=1 // pred_check_branch
      %28 = sbr.rel (0) target = $region9
    $region8: #{_forward_jit.1} parent=1 // pred_region
      %s30 = ssub.s32 2048, 2048
      %31 = vsyncadd [#allocation7], %s30
      %s32 = sshll.u32 [#allocation6], 4
      %s33 = int_to_ptr.vmem [resolvable:$true] %s32
      %38 = dma.hbm_to_vmem [thread:$0]  %s1, 2048, %s33, [#allocation7], 128, 128, 8
    $region9: #{_forward_jit.1} parent=1 // pred_fallthru
      _
    // Predicated region
    $region10: #{_forward_jit.1} parent=1 // pred_check
      _
    $region11: #{_forward_jit.1} parent=1 // pred_check_branch
      %40 = sbr.rel (0) target = $region13
    $region12: #{_forward_jit.1} parent=1 // pred_region
      %s42 = ssub.s32 1024, 1024
      %43 = vsyncadd [#allocation7], %s42
      %s44 = sshll.u32 [#allocation8], 4
      %s45 = int_to_ptr.vmem [resolvable:$true] %s44
      %50 = dma.hbm_to_vmem [thread:$0]  %s2, 1024, %s45, [#allocation7], 64, 64, 4
    $region13: #{_forward_jit.1} parent=1 // pred_fallthru
      _
    // Predicated region
    $region14: #{_forward_jit.1} parent=1 // pred_check
      _
    $region15: #{_forward_jit.1} parent=1 // pred_check_branch
      %52 = sbr.rel (0) target = $region17
    $region16: #{_forward_jit.1} parent=1 // pred_region
      %s54 = ssub.s32 16, 16
      %55 = vsyncadd [#allocation10], %s54
      %s57 = sshll.u32 [#allocation9], 4
      %s58 = int_to_ptr.vmem [resolvable:$true] %s57
      %60 = dma.hbm_to_vmem [thread:$0]  %s3, 16, %s58, [#allocation10]
    $region17: #{_forward_jit.1} parent=1 // pred_fallthru
      _
    // Predicated region
    $region18: #{_forward_jit.1} parent=1 // pred_check
      _
    $region19: #{_forward_jit.1} parent=1 // pred_check_branch
      %62 = sbr.rel (0) target = $region21
    $region20: #{_forward_jit.1} parent=1 // pred_region
      %s64 = ssub.s32 16, 16
      %65 = vsyncadd [#allocation10], %s64
      %s67 = sshll.u32 [#allocation11], 4
      %s68 = int_to_ptr.vmem [resolvable:$true] %s67
      %70 = dma.hbm_to_vmem [thread:$0]  %s4, 16, %s68, [#allocation10]
    $region21: #{_forward_jit.1} parent=1 // pred_fallthru
      _
    // Predicated region
    $region22: #{_forward_jit.1} parent=1 // pred_check
      _
    $region23: #{_forward_jit.1} parent=1 // pred_check_branch
      %72 = sbr.rel (0) target = $region25
    $region24: #{_forward_jit.1} parent=1 // pred_region
      _
    $region25: #{_forward_jit.1} parent=1 // pred_fallthru
      _
    // Predicated region
    $region26: #{_forward_jit.1} parent=1 // pred_check
      _
    $region27: #{_forward_jit.1} parent=1 // pred_check_branch
      %74 = sbr.rel (0) target = $region29
    $region28: #{_forward_jit.1} parent=1 // pred_region
      %75 = dma.done [#allocation4], 128
    $region29: #{_forward_jit.1} parent=1 // pred_fallthru
      _
    // Predicated region
    $region30: #{_forward_jit.1} parent=1 // pred_check
      _
    $region31: #{_forward_jit.1} parent=1 // pred_check_branch
      %77 = sbr.rel (0) target = $region33
    $region32: #{_forward_jit.1} parent=1 // pred_region
      %78 = dma.done [#allocation7], 2048
    $region33: #{_forward_jit.1} parent=1 // pred_fallthru
      _
    // Predicated region
    $region34: #{_forward_jit.1} parent=1 // pred_check
      _
    $region35: #{_forward_jit.1} parent=1 // pred_check_branch
      %80 = sbr.rel (0) target = $region37
    $region36: #{_forward_jit.1} parent=1 // pred_region
      %81 = dma.done [#allocation7], 1024
    $region37: #{_forward_jit.1} parent=1 // pred_fallthru
      _
    // Predicated region
    $region38: #{_forward_jit.1} parent=1 // pred_check
      _
    $region39: #{_forward_jit.1} parent=1 // pred_check_branch
      %83 = sbr.rel (0) target = $region41
    $region40: #{_forward_jit.1} parent=1 // pred_region
      %84 = dma.done [#allocation10], 16
    $region41: #{_forward_jit.1} parent=1 // pred_fallthru
      _
    // Predicated region
    $region42: #{_forward_jit.1} parent=1 // pred_check
      _
    $region43: #{_forward_jit.1} parent=1 // pred_check_branch
      %86 = sbr.rel (0) target = $region45
    $region44: #{_forward_jit.1} parent=1 // pred_region
      %87 = dma.done [#allocation10], 16
    $region45: #{_forward_jit.1} parent=1 // pred_fallthru
      _
    %v89 = vld [vmem:[#allocation3] sm:$0xff]
    %v90 = vld [vmem:[#allocation6] sm:$0xff]
    %v91 = vld [vmem:[#allocation6 + $0x8] sm:$0xff]
    %v92 = vld [vmem:[#allocation6 + $0x10] sm:$0xff]
    %v93 = vld [vmem:[#allocation6 + $0x18] sm:$0xff]
    %v94 = vld [vmem:[#allocation6 + $0x20] sm:$0xff]
    %v95 = vld [vmem:[#allocation6 + $0x28] sm:$0xff]
    %v96 = vld [vmem:[#allocation6 + $0x30] sm:$0xff]
    %v97 = vld [vmem:[#allocation6 + $0x38] sm:$0xff]
    %v98 = vld [vmem:[#allocation6 + $0x40] sm:$0xff]
    %v99 = vld [vmem:[#allocation6 + $0x48] sm:$0xff]
    %v100 = vld [vmem:[#allocation6 + $0x50] sm:$0xff]
    %v101 = vld [vmem:[#allocation6 + $0x58] sm:$0xff]
    %v102 = vld [vmem:[#allocation6 + $0x60] sm:$0xff]
    %v103 = vld [vmem:[#allocation6 + $0x68] sm:$0xff]
    %v104 = vld [vmem:[#allocation6 + $0x70] sm:$0xff]
    %v105 = vld [vmem:[#allocation6 + $0x78] sm:$0xff]
    %v107 = vcombine.high %v89, %v89
    %v109 = vunpack.c.l.s4 1966171168
    %v110 = vunpack.c.0.s8 %v109
    %v111 = vlaneseq
    %v112 = vshrl.u32 %v111, 7
    %v113 = vsub.s32 %v110, %v112
    %v114 = vrot.slane %v89, %v113
    %v116 = vunpack.c.l.s4 1966171168
    %v117 = vunpack.c.0.s8 %v116
    %v118 = vlaneseq
    %v119 = vshrl.u32 %v118, 7
    %v120 = vsub.s32 %v117, %v119
    %v121 = vrot.slane %v107, %v120
    %v122 = vcombine.high %v114, %v114
    %v123 = vcombine.high %v121, %v121
    %v125 = vunpack.c.l.s4 1966171168
    %v126 = vunpack.c.0.s8 %v125
    %v127 = vlaneseq
    %v128 = vshrl.u32 %v127, 7
    %v129 = vsub.s32 %v126, %v128
    %v130 = vrot.slane %v114, %v129
    %v132 = vunpack.c.l.s4 1966171168
    %v133 = vunpack.c.0.s8 %v132
    %v134 = vlaneseq
    %v135 = vshrl.u32 %v134, 7
    %v136 = vsub.s32 %v133, %v135
    %v137 = vrot.slane %v121, %v136
    %v139 = vunpack.c.l.s4 1966171168
    %v140 = vunpack.c.0.s8 %v139
    %v141 = vlaneseq
    %v142 = vshrl.u32 %v141, 7
    %v143 = vsub.s32 %v140, %v142
    %v144 = vrot.slane %v122, %v143
    %v146 = vunpack.c.l.s4 1966171168
    %v147 = vunpack.c.0.s8 %v146
    %v148 = vlaneseq
    %v149 = vshrl.u32 %v148, 7
    %v150 = vsub.s32 %v147, %v149
    %v151 = vrot.slane %v123, %v150
    %v152 = vcombine.high %v130, %v130
    %v153 = vcombine.high %v137, %v137
    %v154 = vcombine.high %v144, %v144
    %v155 = vcombine.high %v151, %v151
    %v156 = vlaneseq
    %v157 = vshrl.u32 %v156, 7
    %v158 = vsub.s32 0, %v157
    %v159 = vrot.slane %v130, %v158
    %v160 = vlaneseq
    %v161 = vshrl.u32 %v160, 7
    %v162 = vsub.s32 0, %v161
    %v163 = vrot.slane %v144, %v162
    %v164 = vlaneseq
    %v165 = vshrl.u32 %v164, 7
    %v166 = vsub.s32 0, %v165
    %v167 = vrot.slane %v152, %v166
    %v168 = vlaneseq
    %v169 = vshrl.u32 %v168, 7
    %v170 = vsub.s32 0, %v169
    %v171 = vrot.slane %v154, %v170
    %v172 = vlaneseq
    %v173 = vshrl.u32 %v172, 7
    %v174 = vsub.s32 0, %v173
    %v175 = vrot.slane %v137, %v174
    %v176 = vlaneseq
    %v177 = vshrl.u32 %v176, 7
    %v178 = vsub.s32 0, %v177
    %v179 = vrot.slane %v151, %v178
    %v180 = vlaneseq
    %v181 = vshrl.u32 %v180, 7
    %v182 = vsub.s32 0, %v181
    %v183 = vrot.slane %v153, %v182
    %v184 = vlaneseq
    %v185 = vshrl.u32 %v184, 7
    %v186 = vsub.s32 0, %v185
    %v187 = vrot.slane %v155, %v186
    %v196 = vadd.f32 %v159, %v90
    %v197 = vadd.f32 %v159, %v91
    %v198 = vadd.f32 %v159, %v92
    %v199 = vadd.f32 %v159, %v93
    %v200 = vadd.f32 %v159, %v94
    %v201 = vadd.f32 %v159, %v95
    %v202 = vadd.f32 %v159, %v96
    %v203 = vadd.f32 %v159, %v97
    %v204 = vadd.f32 %v159, %v98
    %v205 = vadd.f32 %v159, %v99
    %v206 = vadd.f32 %v159, %v100
    %v207 = vadd.f32 %v159, %v101
    %v208 = vadd.f32 %v159, %v102
    %v209 = vadd.f32 %v159, %v103
    %v210 = vadd.f32 %v159, %v104
    %v211 = vadd.f32 %v159, %v105
    %v212 = vadd.f32 %v163, %v90
    %v213 = vadd.f32 %v163, %v91
    %v214 = vadd.f32 %v163, %v92
    %v215 = vadd.f32 %v163, %v93
    %v216 = vadd.f32 %v163, %v94
    %v217 = vadd.f32 %v163, %v95
    %v218 = vadd.f32 %v163, %v96
    %v219 = vadd.f32 %v163, %v97
    %v220 = vadd.f32 %v163, %v98
    %v221 = vadd.f32 %v163, %v99
    %v222 = vadd.f32 %v163, %v100
    %v223 = vadd.f32 %v163, %v101
    %v224 = vadd.f32 %v163, %v102
    %v225 = vadd.f32 %v163, %v103
    %v226 = vadd.f32 %v163, %v104
    %v227 = vadd.f32 %v163, %v105
    %v228 = vadd.f32 %v167, %v90
    %v229 = vadd.f32 %v167, %v91
    %v230 = vadd.f32 %v167, %v92
    %v231 = vadd.f32 %v167, %v93
    %v232 = vadd.f32 %v167, %v94
    %v233 = vadd.f32 %v167, %v95
    %v234 = vadd.f32 %v167, %v96
    %v235 = vadd.f32 %v167, %v97
    %v236 = vadd.f32 %v167, %v98
    %v237 = vadd.f32 %v167, %v99
    %v238 = vadd.f32 %v167, %v100
    %v239 = vadd.f32 %v167, %v101
    %v240 = vadd.f32 %v167, %v102
    %v241 = vadd.f32 %v167, %v103
    %v242 = vadd.f32 %v167, %v104
    %v243 = vadd.f32 %v167, %v105
    %v244 = vadd.f32 %v171, %v90
    %v245 = vadd.f32 %v171, %v91
    %v246 = vadd.f32 %v171, %v92
    %v247 = vadd.f32 %v171, %v93
    %v248 = vadd.f32 %v171, %v94
    %v249 = vadd.f32 %v171, %v95
    %v250 = vadd.f32 %v171, %v96
    %v251 = vadd.f32 %v171, %v97
    %v252 = vadd.f32 %v171, %v98
    %v253 = vadd.f32 %v171, %v99
    %v254 = vadd.f32 %v171, %v100
    %v255 = vadd.f32 %v171, %v101
    %v256 = vadd.f32 %v171, %v102
    %v257 = vadd.f32 %v171, %v103
    %v258 = vadd.f32 %v171, %v104
    %v259 = vadd.f32 %v171, %v105
    %v260 = vadd.f32 %v175, %v90
    %v261 = vadd.f32 %v175, %v91
    %v262 = vadd.f32 %v175, %v92
    %v263 = vadd.f32 %v175, %v93
    %v264 = vadd.f32 %v175, %v94
    %v265 = vadd.f32 %v175, %v95
    %v266 = vadd.f32 %v175, %v96
    %v267 = vadd.f32 %v175, %v97
    %v268 = vadd.f32 %v175, %v98
    %v269 = vadd.f32 %v175, %v99
    %v270 = vadd.f32 %v175, %v100
    %v271 = vadd.f32 %v175, %v101
    %v272 = vadd.f32 %v175, %v102
    %v273 = vadd.f32 %v175, %v103
    %v274 = vadd.f32 %v175, %v104
    %v275 = vadd.f32 %v175, %v105
    %v276 = vadd.f32 %v179, %v90
    %v277 = vadd.f32 %v179, %v91
    %v278 = vadd.f32 %v179, %v92
    %v279 = vadd.f32 %v179, %v93
    %v280 = vadd.f32 %v179, %v94
    %v281 = vadd.f32 %v179, %v95
    %v282 = vadd.f32 %v179, %v96
    %v283 = vadd.f32 %v179, %v97
    %v284 = vadd.f32 %v179, %v98
    %v285 = vadd.f32 %v179, %v99
    %v286 = vadd.f32 %v179, %v100
    %v287 = vadd.f32 %v179, %v101
    %v288 = vadd.f32 %v179, %v102
    %v289 = vadd.f32 %v179, %v103
    %v290 = vadd.f32 %v179, %v104
    %v291 = vadd.f32 %v179, %v105
    %v292 = vadd.f32 %v183, %v90
    %v293 = vadd.f32 %v183, %v91
    %v294 = vadd.f32 %v183, %v92
    %v295 = vadd.f32 %v183, %v93
    %v296 = vadd.f32 %v183, %v94
    %v297 = vadd.f32 %v183, %v95
    %v298 = vadd.f32 %v183, %v96
    %v299 = vadd.f32 %v183, %v97
    %v300 = vadd.f32 %v183, %v98
    %v301 = vadd.f32 %v183, %v99
    %v302 = vadd.f32 %v183, %v100
    %v303 = vadd.f32 %v183, %v101
    %v304 = vadd.f32 %v183, %v102
    %v305 = vadd.f32 %v183, %v103
    %v306 = vadd.f32 %v183, %v104
    %v307 = vadd.f32 %v183, %v105
    %v308 = vadd.f32 %v187, %v90
    %v309 = vadd.f32 %v187, %v91
    %v310 = vadd.f32 %v187, %v92
    %v311 = vadd.f32 %v187, %v93
    %v312 = vadd.f32 %v187, %v94
    %v313 = vadd.f32 %v187, %v95
    %v314 = vadd.f32 %v187, %v96
    %v315 = vadd.f32 %v187, %v97
    %v316 = vadd.f32 %v187, %v98
    %v317 = vadd.f32 %v187, %v99
    %v318 = vadd.f32 %v187, %v100
    %v319 = vadd.f32 %v187, %v101
    %v320 = vadd.f32 %v187, %v102
    %v321 = vadd.f32 %v187, %v103
    %v322 = vadd.f32 %v187, %v104
    %v323 = vadd.f32 %v187, %v105
    %v324 = vmax.f32 %v196, 0.0
    %v325 = vmax.f32 %v197, 0.0
    %v326 = vmax.f32 %v198, 0.0
    %v327 = vmax.f32 %v199, 0.0
    %v328 = vmax.f32 %v200, 0.0
    %v329 = vmax.f32 %v201, 0.0
    %v330 = vmax.f32 %v202, 0.0
    %v331 = vmax.f32 %v203, 0.0
    %v332 = vmax.f32 %v204, 0.0
    %v333 = vmax.f32 %v205, 0.0
    %v334 = vmax.f32 %v206, 0.0
    %v335 = vmax.f32 %v207, 0.0
    %v336 = vmax.f32 %v208, 0.0
    %v337 = vmax.f32 %v209, 0.0
    %v338 = vmax.f32 %v210, 0.0
    %v339 = vmax.f32 %v211, 0.0
    %v340 = vmax.f32 %v212, 0.0
    %v341 = vmax.f32 %v213, 0.0
    %v342 = vmax.f32 %v214, 0.0
    %v343 = vmax.f32 %v215, 0.0
    %v344 = vmax.f32 %v216, 0.0
    %v345 = vmax.f32 %v217, 0.0
    %v346 = vmax.f32 %v218, 0.0
    %v347 = vmax.f32 %v219, 0.0
    %v348 = vmax.f32 %v220, 0.0
    %v349 = vmax.f32 %v221, 0.0
    %v350 = vmax.f32 %v222, 0.0
    %v351 = vmax.f32 %v223, 0.0
    %v352 = vmax.f32 %v224, 0.0
    %v353 = vmax.f32 %v225, 0.0
    %v354 = vmax.f32 %v226, 0.0
    %v355 = vmax.f32 %v227, 0.0
    %v356 = vmax.f32 %v228, 0.0
    %v357 = vmax.f32 %v229, 0.0
    %v358 = vmax.f32 %v230, 0.0
    %v359 = vmax.f32 %v231, 0.0
    %v360 = vmax.f32 %v232, 0.0
    %v361 = vmax.f32 %v233, 0.0
    %v362 = vmax.f32 %v234, 0.0
    %v363 = vmax.f32 %v235, 0.0
    %v364 = vmax.f32 %v236, 0.0
    %v365 = vmax.f32 %v237, 0.0
    %v366 = vmax.f32 %v238, 0.0
    %v367 = vmax.f32 %v239, 0.0
    %v368 = vmax.f32 %v240, 0.0
    %v369 = vmax.f32 %v241, 0.0
    %v370 = vmax.f32 %v242, 0.0
    %v371 = vmax.f32 %v243, 0.0
    %v372 = vmax.f32 %v244, 0.0
    %v373 = vmax.f32 %v245, 0.0
    %v374 = vmax.f32 %v246, 0.0
    %v375 = vmax.f32 %v247, 0.0
    %v376 = vmax.f32 %v248, 0.0
    %v377 = vmax.f32 %v249, 0.0
    %v378 = vmax.f32 %v250, 0.0
    %v379 = vmax.f32 %v251, 0.0
    %v380 = vmax.f32 %v252, 0.0
    %v381 = vmax.f32 %v253, 0.0
    %v382 = vmax.f32 %v254, 0.0
    %v383 = vmax.f32 %v255, 0.0
    %v384 = vmax.f32 %v256, 0.0
    %v385 = vmax.f32 %v257, 0.0
    %v386 = vmax.f32 %v258, 0.0
    %v387 = vmax.f32 %v259, 0.0
    %v388 = vmax.f32 %v260, 0.0
    %v389 = vmax.f32 %v261, 0.0
    %v390 = vmax.f32 %v262, 0.0
    %v391 = vmax.f32 %v263, 0.0
    %v392 = vmax.f32 %v264, 0.0
    %v393 = vmax.f32 %v265, 0.0
    %v394 = vmax.f32 %v266, 0.0
    %v395 = vmax.f32 %v267, 0.0
    %v396 = vmax.f32 %v268, 0.0
    %v397 = vmax.f32 %v269, 0.0
    %v398 = vmax.f32 %v270, 0.0
    %v399 = vmax.f32 %v271, 0.0
    %v400 = vmax.f32 %v272, 0.0
    %v401 = vmax.f32 %v273, 0.0
    %v402 = vmax.f32 %v274, 0.0
    %v403 = vmax.f32 %v275, 0.0
    %v404 = vmax.f32 %v276, 0.0
    %v405 = vmax.f32 %v277, 0.0
    %v406 = vmax.f32 %v278, 0.0
    %v407 = vmax.f32 %v279, 0.0
    %v408 = vmax.f32 %v280, 0.0
    %v409 = vmax.f32 %v281, 0.0
    %v410 = vmax.f32 %v282, 0.0
    %v411 = vmax.f32 %v283, 0.0
    %v412 = vmax.f32 %v284, 0.0
    %v413 = vmax.f32 %v285, 0.0
    %v414 = vmax.f32 %v286, 0.0
    %v415 = vmax.f32 %v287, 0.0
    %v416 = vmax.f32 %v288, 0.0
    %v417 = vmax.f32 %v289, 0.0
    %v418 = vmax.f32 %v290, 0.0
    %v419 = vmax.f32 %v291, 0.0
    %v420 = vmax.f32 %v292, 0.0
    %v421 = vmax.f32 %v293, 0.0
    %v422 = vmax.f32 %v294, 0.0
    %v423 = vmax.f32 %v295, 0.0
    %v424 = vmax.f32 %v296, 0.0
    %v425 = vmax.f32 %v297, 0.0
    %v426 = vmax.f32 %v298, 0.0
    %v427 = vmax.f32 %v299, 0.0
    %v428 = vmax.f32 %v300, 0.0
    %v429 = vmax.f32 %v301, 0.0
    %v430 = vmax.f32 %v302, 0.0
    %v431 = vmax.f32 %v303, 0.0
    %v432 = vmax.f32 %v304, 0.0
    %v433 = vmax.f32 %v305, 0.0
    %v434 = vmax.f32 %v306, 0.0
    %v435 = vmax.f32 %v307, 0.0
    %v436 = vmax.f32 %v308, 0.0
    %v437 = vmax.f32 %v309, 0.0
    %v438 = vmax.f32 %v310, 0.0
    %v439 = vmax.f32 %v311, 0.0
    %v440 = vmax.f32 %v312, 0.0
    %v441 = vmax.f32 %v313, 0.0
    %v442 = vmax.f32 %v314, 0.0
    %v443 = vmax.f32 %v315, 0.0
    %v444 = vmax.f32 %v316, 0.0
    %v445 = vmax.f32 %v317, 0.0
    %v446 = vmax.f32 %v318, 0.0
    %v447 = vmax.f32 %v319, 0.0
    %v448 = vmax.f32 %v320, 0.0
    %v449 = vmax.f32 %v321, 0.0
    %v450 = vmax.f32 %v322, 0.0
    %v451 = vmax.f32 %v323, 0.0
    %v452 = vpack.c.bf16 %v325, %v324
    %v453 = vpack.c.bf16 %v327, %v326
    %v454 = vpack.c.bf16 %v329, %v328
    %v455 = vpack.c.bf16 %v331, %v330
    %v456 = vpack.c.bf16 %v333, %v332
    %v457 = vpack.c.bf16 %v335, %v334
    %v458 = vpack.c.bf16 %v337, %v336
    %v459 = vpack.c.bf16 %v339, %v338
    %v460 = vpack.c.bf16 %v341, %v340
    %v461 = vpack.c.bf16 %v343, %v342
    %v462 = vpack.c.bf16 %v345, %v344
    %v463 = vpack.c.bf16 %v347, %v346
    %v464 = vpack.c.bf16 %v349, %v348
    %v465 = vpack.c.bf16 %v351, %v350
    %v466 = vpack.c.bf16 %v353, %v352
    %v467 = vpack.c.bf16 %v355, %v354
    %v468 = vpack.c.bf16 %v357, %v356
    %v469 = vpack.c.bf16 %v359, %v358
    %v470 = vpack.c.bf16 %v361, %v360
    %v471 = vpack.c.bf16 %v363, %v362
    %v472 = vpack.c.bf16 %v365, %v364
    %v473 = vpack.c.bf16 %v367, %v366
    %v474 = vpack.c.bf16 %v369, %v368
    %v475 = vpack.c.bf16 %v371, %v370
    %v476 = vpack.c.bf16 %v373, %v372
    %v477 = vpack.c.bf16 %v375, %v374
    %v478 = vpack.c.bf16 %v377, %v376
    %v479 = vpack.c.bf16 %v379, %v378
    %v480 = vpack.c.bf16 %v381, %v380
    %v481 = vpack.c.bf16 %v383, %v382
    %v482 = vpack.c.bf16 %v385, %v384
    %v483 = vpack.c.bf16 %v387, %v386
    %v484 = vpack.c.bf16 %v389, %v388
    %v485 = vpack.c.bf16 %v391, %v390
    %v486 = vpack.c.bf16 %v393, %v392
    %v487 = vpack.c.bf16 %v395, %v394
    %v488 = vpack.c.bf16 %v397, %v396
    %v489 = vpack.c.bf16 %v399, %v398
    %v490 = vpack.c.bf16 %v401, %v400
    %v491 = vpack.c.bf16 %v403, %v402
    %v492 = vpack.c.bf16 %v405, %v404
    %v493 = vpack.c.bf16 %v407, %v406
    %v494 = vpack.c.bf16 %v409, %v408
    %v495 = vpack.c.bf16 %v411, %v410
    %v496 = vpack.c.bf16 %v413, %v412
    %v497 = vpack.c.bf16 %v415, %v414
    %v498 = vpack.c.bf16 %v417, %v416
    %v499 = vpack.c.bf16 %v419, %v418
    %v500 = vpack.c.bf16 %v421, %v420
    %v501 = vpack.c.bf16 %v423, %v422
    %v502 = vpack.c.bf16 %v425, %v424
    %v503 = vpack.c.bf16 %v427, %v426
    %v504 = vpack.c.bf16 %v429, %v428
    %v505 = vpack.c.bf16 %v431, %v430
    %v506 = vpack.c.bf16 %v433, %v432
    %v507 = vpack.c.bf16 %v435, %v434
    %v508 = vpack.c.bf16 %v437, %v436
    %v509 = vpack.c.bf16 %v439, %v438
    %v510 = vpack.c.bf16 %v441, %v440
    %v511 = vpack.c.bf16 %v443, %v442
    %v512 = vpack.c.bf16 %v445, %v444
    %v513 = vpack.c.bf16 %v447, %v446
    %v514 = vpack.c.bf16 %v449, %v448
    %v515 = vpack.c.bf16 %v451, %v450
    %v516 = vld [vmem:[#allocation8] sm:$0xf]
    %v517 = vld [vmem:[#allocation8 + $0x4] sm:$0xf]
    %v518 = vld [vmem:[#allocation8 + $0x8] sm:$0xf]
    %v519 = vld [vmem:[#allocation8 + $0xc] sm:$0xf]
    %v520 = vld [vmem:[#allocation8 + $0x10] sm:$0xf]
    %v521 = vld [vmem:[#allocation8 + $0x14] sm:$0xf]
    %v522 = vld [vmem:[#allocation8 + $0x18] sm:$0xf]
    %v523 = vld [vmem:[#allocation8 + $0x1c] sm:$0xf]
    %v524 = vld [vmem:[#allocation8 + $0x20] sm:$0xf]
    %v525 = vld [vmem:[#allocation8 + $0x24] sm:$0xf]
    %v526 = vld [vmem:[#allocation8 + $0x28] sm:$0xf]
    %v527 = vld [vmem:[#allocation8 + $0x2c] sm:$0xf]
    %v528 = vld [vmem:[#allocation8 + $0x30] sm:$0xf]
    %v529 = vld [vmem:[#allocation8 + $0x34] sm:$0xf]
    %v530 = vld [vmem:[#allocation8 + $0x38] sm:$0xf]
    %v531 = vld [vmem:[#allocation8 + $0x3c] sm:$0xf]
    %v532 = vld [vmem:[#allocation9] sm:$0x1]
    %v534 = vlaneseq
    %v535 = vshrl.u32 %v534, 7
    %v536 = vsub.s32 0, %v535
    %v537 = vrot.slane %v532, %v536
    %v555 = vunpack.c.l.b16 %v516
    %v556 = vunpack.c.l.b16 %v517
    %v557 = vunpack.c.l.b16 %v518
    %v558 = vunpack.c.l.b16 %v519
    %v559 = vunpack.c.l.b16 %v520
    %v560 = vunpack.c.l.b16 %v521
    %v561 = vunpack.c.l.b16 %v522
    %v562 = vunpack.c.l.b16 %v523
    %v563 = vunpack.c.l.b16 %v524
    %v564 = vunpack.c.l.b16 %v525
    %v565 = vunpack.c.l.b16 %v526
    %v566 = vunpack.c.l.b16 %v527
    %v567 = vunpack.c.l.b16 %v528
    %v568 = vunpack.c.l.b16 %v529
    %v569 = vunpack.c.l.b16 %v530
    %v570 = vunpack.c.l.b16 %v531
    %v571 = vpack.c.b16 %v556, %v555
    %v572 = vpack.c.b16 %v558, %v557
    %v573 = vpack.c.b16 %v560, %v559
    %v574 = vpack.c.b16 %v562, %v561
    %v575 = vpack.c.b16 %v564, %v563
    %v576 = vpack.c.b16 %v566, %v565
    %v577 = vpack.c.b16 %v568, %v567
    %v578 = vpack.c.b16 %v570, %v569
    %587 = vmatprep.subr.bf16.mxu0 0
    %588 = vmatpush1.bf16.msra.mxu0 %v571
    %589 = vmatprep.subr.bf16.mxu0 0
    %590 = vmatpush1.bf16.msra.mxu0 %v572
    %591 = vmatprep.subr.bf16.mxu0 0
    %592 = vmatpush1.bf16.msra.mxu0 %v573
    %593 = vmatprep.subr.bf16.mxu0 0
    %594 = vmatpush1.bf16.msra.mxu0 %v574
    %595 = vmatprep.subr.bf16.mxu0 0
    %596 = vmatpush1.bf16.msra.mxu0 %v575
    %597 = vmatprep.subr.bf16.mxu0 0
    %598 = vmatpush1.bf16.msra.mxu0 %v576
    %599 = vmatprep.subr.bf16.mxu0 0
    %600 = vmatpush1.bf16.msra.mxu0 %v577
    %601 = vmatprep.subr.bf16.mxu0 0
    %602 = vmatpush1.bf16.msra.mxu0 %v578
    %603 = vmatprep.subr.bf16.mxu0 0
    %604 = vmatpush1.bf16.msra.mxu0 0
    %605 = vmatprep.subr.bf16.mxu0 0
    %606 = vmatpush1.bf16.msra.mxu0 0
    %607 = vmatprep.subr.bf16.mxu0 0
    %608 = vmatpush1.bf16.msra.mxu0 0
    %609 = vmatprep.subr.bf16.mxu0 0
    %610 = vmatpush1.bf16.msra.mxu0 0
    %611 = vmatprep.subr.bf16.mxu0 0
    %612 = vmatpush1.bf16.msra.mxu0 0
    %613 = vmatprep.subr.bf16.mxu0 0
    %614 = vmatpush1.bf16.msra.mxu0 0
    %615 = vmatprep.subr.bf16.mxu0 0
    %616 = vmatpush1.bf16.msra.mxu0 0
    %617 = vmatprep.subr.bf16.mxu0 0
    %618 = vmatpush1.bf16.msra.mxu0 0
    %619 = vmatprep.mubr.bf16.mxu0 0
    %620 = vmatmul.mubr.bf16.gmra.mrb[0].mxu0 %v452
    %v621 = vpop.f32.mrb[0].mxu0
    %v622 = vadd.f32 %v537, %v621
    %v623 = vpop.f32.mrb[0].mxu0
    %v624 = vpop.f32.mrb[0].mxu0
    %v625 = vadd.f32 %v537, %v624
    %v626 = vpop.f32.mrb[0].mxu0
    %627 = vmatprep.mubr.bf16.mxu0 0
    %628 = vmatmul.mubr.bf16.gmra.mrb[0].mxu0 %v453
    %v629 = vpop.f32.mrb[0].mxu0
    %v630 = vadd.f32 %v537, %v629
    %v631 = vpop.f32.mrb[0].mxu0
    %v632 = vpop.f32.mrb[0].mxu0
    %v633 = vadd.f32 %v537, %v632
    %v634 = vpop.f32.mrb[0].mxu0
    %635 = vmatprep.mubr.bf16.mxu0 0
    %636 = vmatmul.mubr.bf16.gmra.mrb[0].mxu0 %v454
    %v637 = vpop.f32.mrb[0].mxu0
    %v638 = vadd.f32 %v537, %v637
    %v639 = vpop.f32.mrb[0].mxu0
    %v640 = vpop.f32.mrb[0].mxu0
    %v641 = vadd.f32 %v537, %v640
    %v642 = vpop.f32.mrb[0].mxu0
    %643 = vmatprep.mubr.bf16.mxu0 0
    %644 = vmatmul.mubr.bf16.gmra.mrb[0].mxu0 %v455
    %v645 = vpop.f32.mrb[0].mxu0
    %v646 = vadd.f32 %v537, %v645
    %v647 = vpop.f32.mrb[0].mxu0
    %v648 = vpop.f32.mrb[0].mxu0
    %v649 = vadd.f32 %v537, %v648
    %v650 = vpop.f32.mrb[0].mxu0
    %651 = vmatprep.mubr.bf16.mxu0 0
    %652 = vmatmul.mubr.bf16.gmra.mrb[0].mxu0 %v456
    %v653 = vpop.f32.mrb[0].mxu0
    %v654 = vadd.f32 %v537, %v653
    %v655 = vpop.f32.mrb[0].mxu0
    %v656 = vpop.f32.mrb[0].mxu0
    %v657 = vadd.f32 %v537, %v656
    %v658 = vpop.f32.mrb[0].mxu0
    %659 = vmatprep.mubr.bf16.mxu0 0
    %660 = vmatmul.mubr.bf16.gmra.mrb[0].mxu0 %v457
    %v661 = vpop.f32.mrb[0].mxu0
    %v662 = vadd.f32 %v537, %v661
    %v663 = vpop.f32.mrb[0].mxu0
    %v664 = vpop.f32.mrb[0].mxu0
    %v665 = vadd.f32 %v537, %v664
    %v666 = vpop.f32.mrb[0].mxu0
    %667 = vmatprep.mubr.bf16.mxu0 0
    %668 = vmatmul.mubr.bf16.gmra.mrb[0].mxu0 %v458
    %v669 = vpop.f32.mrb[0].mxu0
    %v670 = vadd.f32 %v537, %v669
    %v671 = vpop.f32.mrb[0].mxu0
    %v672 = vpop.f32.mrb[0].mxu0
    %v673 = vadd.f32 %v537, %v672
    %v674 = vpop.f32.mrb[0].mxu0
    %675 = vmatprep.mubr.bf16.mxu0 0
    %676 = vmatmul.mubr.bf16.gmra.mrb[0].mxu0 %v459
    %v677 = vpop.f32.mrb[0].mxu0
    %v678 = vadd.f32 %v537, %v677
    %v679 = vpop.f32.mrb[0].mxu0
    %v680 = vpop.f32.mrb[0].mxu0
    %v681 = vadd.f32 %v537, %v680
    %v682 = vpop.f32.mrb[0].mxu0
    %683 = vmatprep.mubr.bf16.mxu0 0
    %684 = vmatmul.mubr.bf16.gmra.mrb[0].mxu0 %v460
    %v685 = vpop.f32.mrb[0].mxu0
    %v686 = vadd.f32 %v537, %v685
    %v687 = vpop.f32.mrb[0].mxu0
    %v688 = vpop.f32.mrb[0].mxu0
    %v689 = vadd.f32 %v537, %v688
    %v690 = vpop.f32.mrb[0].mxu0
    %691 = vmatprep.mubr.bf16.mxu0 0
    %692 = vmatmul.mubr.bf16.gmra.mrb[0].mxu0 %v461
    %v693 = vpop.f32.mrb[0].mxu0
    %v694 = vadd.f32 %v537, %v693
    %v695 = vpop.f32.mrb[0].mxu0
    %v696 = vpop.f32.mrb[0].mxu0
    %v697 = vadd.f32 %v537, %v696
    %v698 = vpop.f32.mrb[0].mxu0
    %699 = vmatprep.mubr.bf16.mxu0 0
    %700 = vmatmul.mubr.bf16.gmra.mrb[0].mxu0 %v462
    %v701 = vpop.f32.mrb[0].mxu0
    %v702 = vadd.f32 %v537, %v701
    %v703 = vpop.f32.mrb[0].mxu0
    %v704 = vpop.f32.mrb[0].mxu0
    %v705 = vadd.f32 %v537, %v704
    %v706 = vpop.f32.mrb[0].mxu0
    %707 = vmatprep.mubr.bf16.mxu0 0
    %708 = vmatmul.mubr.bf16.gmra.mrb[0].mxu0 %v463
    %v709 = vpop.f32.mrb[0].mxu0
    %v710 = vadd.f32 %v537, %v709
    %v711 = vpop.f32.mrb[0].mxu0
    %v712 = vpop.f32.mrb[0].mxu0
    %v713 = vadd.f32 %v537, %v712
    %v714 = vpop.f32.mrb[0].mxu0
    %715 = vmatprep.mubr.bf16.mxu0 0
    %716 = vmatmul.mubr.bf16.gmra.mrb[0].mxu0 %v464
    %v717 = vpop.f32.mrb[0].mxu0
    %v718 = vadd.f32 %v537, %v717
    %v719 = vpop.f32.mrb[0].mxu0
    %v720 = vpop.f32.mrb[0].mxu0
    %v721 = vadd.f32 %v537, %v720
    %v722 = vpop.f32.mrb[0].mxu0
    %723 = vmatprep.mubr.bf16.mxu0 0
    %724 = vmatmul.mubr.bf16.gmra.mrb[0].mxu0 %v465
    %v725 = vpop.f32.mrb[0].mxu0
    %v726 = vadd.f32 %v537, %v725
    %v727 = vpop.f32.mrb[0].mxu0
    %v728 = vpop.f32.mrb[0].mxu0
    %v729 = vadd.f32 %v537, %v728
    %v730 = vpop.f32.mrb[0].mxu0
    %731 = vmatprep.mubr.bf16.mxu0 0
    %732 = vmatmul.mubr.bf16.gmra.mrb[0].mxu0 %v466
    %v733 = vpop.f32.mrb[0].mxu0
    %v734 = vadd.f32 %v537, %v733
    %v735 = vpop.f32.mrb[0].mxu0
    %v736 = vpop.f32.mrb[0].mxu0
    %v737 = vadd.f32 %v537, %v736
    %v738 = vpop.f32.mrb[0].mxu0
    %739 = vmatprep.mubr.bf16.mxu0 0
    %740 = vmatmul.mubr.bf16.gmra.mrb[0].mxu0 %v467
    %v741 = vpop.f32.mrb[0].mxu0
    %v742 = vadd.f32 %v537, %v741
    %v743 = vpop.f32.mrb[0].mxu0
    %v744 = vpop.f32.mrb[0].mxu0
    %v745 = vadd.f32 %v537, %v744
    %v746 = vpop.f32.mrb[0].mxu0
    %747 = vmatprep.mubr.bf16.mxu0 0
    %748 = vmatmul.mubr.bf16.gmra.mrb[0].mxu0 %v468
    %v749 = vpop.f32.mrb[0].mxu0
    %v750 = vadd.f32 %v537, %v749
    %v751 = vpop.f32.mrb[0].mxu0
    %v752 = vpop.f32.mrb[0].mxu0
    %v753 = vadd.f32 %v537, %v752
    %v754 = vpop.f32.mrb[0].mxu0
    %755 = vmatprep.mubr.bf16.mxu0 0
    %756 = vmatmul.mubr.bf16.gmra.mrb[0].mxu0 %v469
    %v757 = vpop.f32.mrb[0].mxu0
    %v758 = vadd.f32 %v537, %v757
    %v759 = vpop.f32.mrb[0].mxu0
    %v760 = vpop.f32.mrb[0].mxu0
    %v761 = vadd.f32 %v537, %v760
    %v762 = vpop.f32.mrb[0].mxu0
    %763 = vmatprep.mubr.bf16.mxu0 0
    %764 = vmatmul.mubr.bf16.gmra.mrb[0].mxu0 %v470
    %v765 = vpop.f32.mrb[0].mxu0
    %v766 = vadd.f32 %v537, %v765
    %v767 = vpop.f32.mrb[0].mxu0
    %v768 = vpop.f32.mrb[0].mxu0
    %v769 = vadd.f32 %v537, %v768
    %v770 = vpop.f32.mrb[0].mxu0
    %771 = vmatprep.mubr.bf16.mxu0 0
    %772 = vmatmul.mubr.bf16.gmra.mrb[0].mxu0 %v471
    %v773 = vpop.f32.mrb[0].mxu0
    %v774 = vadd.f32 %v537, %v773
    %v775 = vpop.f32.mrb[0].mxu0
    %v776 = vpop.f32.mrb[0].mxu0
    %v777 = vadd.f32 %v537, %v776
    %v778 = vpop.f32.mrb[0].mxu0
    %779 = vmatprep.mubr.bf16.mxu0 0
    %780 = vmatmul.mubr.bf16.gmra.mrb[0].mxu0 %v472
    %v781 = vpop.f32.mrb[0].mxu0
    %v782 = vadd.f32 %v537, %v781
    %v783 = vpop.f32.mrb[0].mxu0
    %v784 = vpop.f32.mrb[0].mxu0
    %v785 = vadd.f32 %v537, %v784
    %v786 = vpop.f32.mrb[0].mxu0
    %787 = vmatprep.mubr.bf16.mxu0 0
    %788 = vmatmul.mubr.bf16.gmra.mrb[0].mxu0 %v473
    %v789 = vpop.f32.mrb[0].mxu0
    %v790 = vadd.f32 %v537, %v789
    %v791 = vpop.f32.mrb[0].mxu0
    %v792 = vpop.f32.mrb[0].mxu0
    %v793 = vadd.f32 %v537, %v792
    %v794 = vpop.f32.mrb[0].mxu0
    %795 = vmatprep.mubr.bf16.mxu0 0
    %796 = vmatmul.mubr.bf16.gmra.mrb[0].mxu0 %v474
    %v797 = vpop.f32.mrb[0].mxu0
    %v798 = vadd.f32 %v537, %v797
    %v799 = vpop.f32.mrb[0].mxu0
    %v800 = vpop.f32.mrb[0].mxu0
    %v801 = vadd.f32 %v537, %v800
    %v802 = vpop.f32.mrb[0].mxu0
    %803 = vmatprep.mubr.bf16.mxu0 0
    %804 = vmatmul.mubr.bf16.gmra.mrb[0].mxu0 %v475
    %v805 = vpop.f32.mrb[0].mxu0
    %v806 = vadd.f32 %v537, %v805
    %v807 = vpop.f32.mrb[0].mxu0
    %v808 = vpop.f32.mrb[0].mxu0
    %v809 = vadd.f32 %v537, %v808
    %v810 = vpop.f32.mrb[0].mxu0
    %811 = vmatprep.mubr.bf16.mxu0 0
    %812 = vmatmul.mubr.bf16.gmra.mrb[0].mxu0 %v476
    %v813 = vpop.f32.mrb[0].mxu0
    %v814 = vadd.f32 %v537, %v813
    %v815 = vpop.f32.mrb[0].mxu0
    %v816 = vpop.f32.mrb[0].mxu0
    %v817 = vadd.f32 %v537, %v816
    %v818 = vpop.f32.mrb[0].mxu0
    %819 = vmatprep.mubr.bf16.mxu0 0
    %820 = vmatmul.mubr.bf16.gmra.mrb[0].mxu0 %v477
    %v821 = vpop.f32.mrb[0].mxu0
    %v822 = vadd.f32 %v537, %v821
    %v823 = vpop.f32.mrb[0].mxu0
    %v824 = vpop.f32.mrb[0].mxu0
    %v825 = vadd.f32 %v537, %v824
    %v826 = vpop.f32.mrb[0].mxu0
    %827 = vmatprep.mubr.bf16.mxu0 0
    %828 = vmatmul.mubr.bf16.gmra.mrb[0].mxu0 %v478
    %v829 = vpop.f32.mrb[0].mxu0
    %v830 = vadd.f32 %v537, %v829
    %v831 = vpop.f32.mrb[0].mxu0
    %v832 = vpop.f32.mrb[0].mxu0
    %v833 = vadd.f32 %v537, %v832
    %v834 = vpop.f32.mrb[0].mxu0
    %835 = vmatprep.mubr.bf16.mxu0 0
    %836 = vmatmul.mubr.bf16.gmra.mrb[0].mxu0 %v479
    %v837 = vpop.f32.mrb[0].mxu0
    %v838 = vadd.f32 %v537, %v837
    %v839 = vpop.f32.mrb[0].mxu0
    %v840 = vpop.f32.mrb[0].mxu0
    %v841 = vadd.f32 %v537, %v840
    %v842 = vpop.f32.mrb[0].mxu0
    %843 = vmatprep.mubr.bf16.mxu0 0
    %844 = vmatmul.mubr.bf16.gmra.mrb[0].mxu0 %v480
    %v845 = vpop.f32.mrb[0].mxu0
    %v846 = vadd.f32 %v537, %v845
    %v847 = vpop.f32.mrb[0].mxu0
    %v848 = vpop.f32.mrb[0].mxu0
    %v849 = vadd.f32 %v537, %v848
    %v850 = vpop.f32.mrb[0].mxu0
    %851 = vmatprep.mubr.bf16.mxu0 0
    %852 = vmatmul.mubr.bf16.gmra.mrb[0].mxu0 %v481
    %v853 = vpop.f32.mrb[0].mxu0
    %v854 = vadd.f32 %v537, %v853
    %v855 = vpop.f32.mrb[0].mxu0
    %v856 = vpop.f32.mrb[0].mxu0
    %v857 = vadd.f32 %v537, %v856
    %v858 = vpop.f32.mrb[0].mxu0
    %859 = vmatprep.mubr.bf16.mxu0 0
    %860 = vmatmul.mubr.bf16.gmra.mrb[0].mxu0 %v482
    %v861 = vpop.f32.mrb[0].mxu0
    %v862 = vadd.f32 %v537, %v861
    %v863 = vpop.f32.mrb[0].mxu0
    %v864 = vpop.f32.mrb[0].mxu0
    %v865 = vadd.f32 %v537, %v864
    %v866 = vpop.f32.mrb[0].mxu0
    %867 = vmatprep.mubr.bf16.mxu0 0
    %868 = vmatmul.mubr.bf16.gmra.mrb[0].mxu0 %v483
    %v869 = vpop.f32.mrb[0].mxu0
    %v870 = vadd.f32 %v537, %v869
    %v871 = vpop.f32.mrb[0].mxu0
    %v872 = vpop.f32.mrb[0].mxu0
    %v873 = vadd.f32 %v537, %v872
    %v874 = vpop.f32.mrb[0].mxu0
    %875 = vmatprep.mubr.bf16.mxu0 0
    %876 = vmatmul.mubr.bf16.gmra.mrb[0].mxu0 %v484
    %v877 = vpop.f32.mrb[0].mxu0
    %v878 = vadd.f32 %v537, %v877
    %v879 = vpop.f32.mrb[0].mxu0
    %v880 = vpop.f32.mrb[0].mxu0
    %v881 = vadd.f32 %v537, %v880
    %v882 = vpop.f32.mrb[0].mxu0
    %883 = vmatprep.mubr.bf16.mxu0 0
    %884 = vmatmul.mubr.bf16.gmra.mrb[0].mxu0 %v485
    %v885 = vpop.f32.mrb[0].mxu0
    %v886 = vadd.f32 %v537, %v885
    %v887 = vpop.f32.mrb[0].mxu0
    %v888 = vpop.f32.mrb[0].mxu0
    %v889 = vadd.f32 %v537, %v888
    %v890 = vpop.f32.mrb[0].mxu0
    %891 = vmatprep.mubr.bf16.mxu0 0
    %892 = vmatmul.mubr.bf16.gmra.mrb[0].mxu0 %v486
    %v893 = vpop.f32.mrb[0].mxu0
    %v894 = vadd.f32 %v537, %v893
    %v895 = vpop.f32.mrb[0].mxu0
    %v896 = vpop.f32.mrb[0].mxu0
    %v897 = vadd.f32 %v537, %v896
    %v898 = vpop.f32.mrb[0].mxu0
    %899 = vmatprep.mubr.bf16.mxu0 0
    %900 = vmatmul.mubr.bf16.gmra.mrb[0].mxu0 %v487
    %v901 = vpop.f32.mrb[0].mxu0
    %v902 = vadd.f32 %v537, %v901
    %v903 = vpop.f32.mrb[0].mxu0
    %v904 = vpop.f32.mrb[0].mxu0
    %v905 = vadd.f32 %v537, %v904
    %v906 = vpop.f32.mrb[0].mxu0
    %907 = vmatprep.mubr.bf16.mxu0 0
    %908 = vmatmul.mubr.bf16.gmra.mrb[0].mxu0 %v488
    %v909 = vpop.f32.mrb[0].mxu0
    %v910 = vadd.f32 %v537, %v909
    %v911 = vpop.f32.mrb[0].mxu0
    %v912 = vpop.f32.mrb[0].mxu0
    %v913 = vadd.f32 %v537, %v912
    %v914 = vpop.f32.mrb[0].mxu0
    %915 = vmatprep.mubr.bf16.mxu0 0
    %916 = vmatmul.mubr.bf16.gmra.mrb[0].mxu0 %v489
    %v917 = vpop.f32.mrb[0].mxu0
    %v918 = vadd.f32 %v537, %v917
    %v919 = vpop.f32.mrb[0].mxu0
    %v920 = vpop.f32.mrb[0].mxu0
    %v921 = vadd.f32 %v537, %v920
    %v922 = vpop.f32.mrb[0].mxu0
    %923 = vmatprep.mubr.bf16.mxu0 0
    %924 = vmatmul.mubr.bf16.gmra.mrb[0].mxu0 %v490
    %v925 = vpop.f32.mrb[0].mxu0
    %v926 = vadd.f32 %v537, %v925
    %v927 = vpop.f32.mrb[0].mxu0
    %v928 = vpop.f32.mrb[0].mxu0
    %v929 = vadd.f32 %v537, %v928
    %v930 = vpop.f32.mrb[0].mxu0
    %931 = vmatprep.mubr.bf16.mxu0 0
    %932 = vmatmul.mubr.bf16.gmra.mrb[0].mxu0 %v491
    %v933 = vpop.f32.mrb[0].mxu0
    %v934 = vadd.f32 %v537, %v933
    %v935 = vpop.f32.mrb[0].mxu0
    %v936 = vpop.f32.mrb[0].mxu0
    %v937 = vadd.f32 %v537, %v936
    %v938 = vpop.f32.mrb[0].mxu0
    %939 = vmatprep.mubr.bf16.mxu0 0
    %940 = vmatmul.mubr.bf16.gmra.mrb[0].mxu0 %v492
    %v941 = vpop.f32.mrb[0].mxu0
    %v942 = vadd.f32 %v537, %v941
    %v943 = vpop.f32.mrb[0].mxu0
    %v944 = vpop.f32.mrb[0].mxu0
    %v945 = vadd.f32 %v537, %v944
    %v946 = vpop.f32.mrb[0].mxu0
    %947 = vmatprep.mubr.bf16.mxu0 0
    %948 = vmatmul.mubr.bf16.gmra.mrb[0].mxu0 %v493
    %v949 = vpop.f32.mrb[0].mxu0
    %v950 = vadd.f32 %v537, %v949
    %v951 = vpop.f32.mrb[0].mxu0
    %v952 = vpop.f32.mrb[0].mxu0
    %v953 = vadd.f32 %v537, %v952
    %v954 = vpop.f32.mrb[0].mxu0
    %955 = vmatprep.mubr.bf16.mxu0 0
    %956 = vmatmul.mubr.bf16.gmra.mrb[0].mxu0 %v494
    %v957 = vpop.f32.mrb[0].mxu0
    %v958 = vadd.f32 %v537, %v957
    %v959 = vpop.f32.mrb[0].mxu0
    %v960 = vpop.f32.mrb[0].mxu0
    %v961 = vadd.f32 %v537, %v960
    %v962 = vpop.f32.mrb[0].mxu0
    %963 = vmatprep.mubr.bf16.mxu0 0
    %964 = vmatmul.mubr.bf16.gmra.mrb[0].mxu0 %v495
    %v965 = vpop.f32.mrb[0].mxu0
    %v966 = vadd.f32 %v537, %v965
    %v967 = vpop.f32.mrb[0].mxu0
    %v968 = vpop.f32.mrb[0].mxu0
    %v969 = vadd.f32 %v537, %v968
    %v970 = vpop.f32.mrb[0].mxu0
    %971 = vmatprep.mubr.bf16.mxu0 0
    %972 = vmatmul.mubr.bf16.gmra.mrb[0].mxu0 %v496
    %v973 = vpop.f32.mrb[0].mxu0
    %v974 = vadd.f32 %v537, %v973
    %v975 = vpop.f32.mrb[0].mxu0
    %v976 = vpop.f32.mrb[0].mxu0
    %v977 = vadd.f32 %v537, %v976
    %v978 = vpop.f32.mrb[0].mxu0
    %979 = vmatprep.mubr.bf16.mxu0 0
    %980 = vmatmul.mubr.bf16.gmra.mrb[0].mxu0 %v497
    %v981 = vpop.f32.mrb[0].mxu0
    %v982 = vadd.f32 %v537, %v981
    %v983 = vpop.f32.mrb[0].mxu0
    %v984 = vpop.f32.mrb[0].mxu0
    %v985 = vadd.f32 %v537, %v984
    %v986 = vpop.f32.mrb[0].mxu0
    %987 = vmatprep.mubr.bf16.mxu0 0
    %988 = vmatmul.mubr.bf16.gmra.mrb[0].mxu0 %v498
    %v989 = vpop.f32.mrb[0].mxu0
    %v990 = vadd.f32 %v537, %v989
    %v991 = vpop.f32.mrb[0].mxu0
    %v992 = vpop.f32.mrb[0].mxu0
    %v993 = vadd.f32 %v537, %v992
    %v994 = vpop.f32.mrb[0].mxu0
    %995 = vmatprep.mubr.bf16.mxu0 0
    %996 = vmatmul.mubr.bf16.gmra.mrb[0].mxu0 %v499
    %v997 = vpop.f32.mrb[0].mxu0
    %v998 = vadd.f32 %v537, %v997
    %v999 = vpop.f32.mrb[0].mxu0
    %v1000 = vpop.f32.mrb[0].mxu0
    %v1001 = vadd.f32 %v537, %v1000
    %v1002 = vpop.f32.mrb[0].mxu0
    %1003 = vmatprep.mubr.bf16.mxu0 0
    %1004 = vmatmul.mubr.bf16.gmra.mrb[0].mxu0 %v500
    %v1005 = vpop.f32.mrb[0].mxu0
    %v1006 = vadd.f32 %v537, %v1005
    %v1007 = vpop.f32.mrb[0].mxu0
    %v1008 = vpop.f32.mrb[0].mxu0
    %v1009 = vadd.f32 %v537, %v1008
    %v1010 = vpop.f32.mrb[0].mxu0
    %1011 = vmatprep.mubr.bf16.mxu0 0
    %1012 = vmatmul.mubr.bf16.gmra.mrb[0].mxu0 %v501
    %v1013 = vpop.f32.mrb[0].mxu0
    %v1014 = vadd.f32 %v537, %v1013
    %v1015 = vpop.f32.mrb[0].mxu0
    %v1016 = vpop.f32.mrb[0].mxu0
    %v1017 = vadd.f32 %v537, %v1016
    %v1018 = vpop.f32.mrb[0].mxu0
    %1019 = vmatprep.mubr.bf16.mxu0 0
    %1020 = vmatmul.mubr.bf16.gmra.mrb[0].mxu0 %v502
    %v1021 = vpop.f32.mrb[0].mxu0
    %v1022 = vadd.f32 %v537, %v1021
    %v1023 = vpop.f32.mrb[0].mxu0
    %v1024 = vpop.f32.mrb[0].mxu0
    %v1025 = vadd.f32 %v537, %v1024
    %v1026 = vpop.f32.mrb[0].mxu0
    %1027 = vmatprep.mubr.bf16.mxu0 0
    %1028 = vmatmul.mubr.bf16.gmra.mrb[0].mxu0 %v503
    %v1029 = vpop.f32.mrb[0].mxu0
    %v1030 = vadd.f32 %v537, %v1029
    %v1031 = vpop.f32.mrb[0].mxu0
    %v1032 = vpop.f32.mrb[0].mxu0
    %v1033 = vadd.f32 %v537, %v1032
    %v1034 = vpop.f32.mrb[0].mxu0
    %1035 = vmatprep.mubr.bf16.mxu0 0
    %1036 = vmatmul.mubr.bf16.gmra.mrb[0].mxu0 %v504
    %v1037 = vpop.f32.mrb[0].mxu0
    %v1038 = vadd.f32 %v537, %v1037
    %v1039 = vpop.f32.mrb[0].mxu0
    %v1040 = vpop.f32.mrb[0].mxu0
    %v1041 = vadd.f32 %v537, %v1040
    %v1042 = vpop.f32.mrb[0].mxu0
    %1043 = vmatprep.mubr.bf16.mxu0 0
    %1044 = vmatmul.mubr.bf16.gmra.mrb[0].mxu0 %v505
    %v1045 = vpop.f32.mrb[0].mxu0
    %v1046 = vadd.f32 %v537, %v1045
    %v1047 = vpop.f32.mrb[0].mxu0
    %v1048 = vpop.f32.mrb[0].mxu0
    %v1049 = vadd.f32 %v537, %v1048
    %v1050 = vpop.f32.mrb[0].mxu0
    %1051 = vmatprep.mubr.bf16.mxu0 0
    %1052 = vmatmul.mubr.bf16.gmra.mrb[0].mxu0 %v506
    %v1053 = vpop.f32.mrb[0].mxu0
    %v1054 = vadd.f32 %v537, %v1053
    %v1055 = vpop.f32.mrb[0].mxu0
    %v1056 = vpop.f32.mrb[0].mxu0
    %v1057 = vadd.f32 %v537, %v1056
    %v1058 = vpop.f32.mrb[0].mxu0
    %1059 = vmatprep.mubr.bf16.mxu0 0
    %1060 = vmatmul.mubr.bf16.gmra.mrb[0].mxu0 %v507
    %v1061 = vpop.f32.mrb[0].mxu0
    %v1062 = vadd.f32 %v537, %v1061
    %v1063 = vpop.f32.mrb[0].mxu0
    %v1064 = vpop.f32.mrb[0].mxu0
    %v1065 = vadd.f32 %v537, %v1064
    %v1066 = vpop.f32.mrb[0].mxu0
    %1067 = vmatprep.mubr.bf16.mxu0 0
    %1068 = vmatmul.mubr.bf16.gmra.mrb[0].mxu0 %v508
    %v1069 = vpop.f32.mrb[0].mxu0
    %v1070 = vadd.f32 %v537, %v1069
    %v1071 = vpop.f32.mrb[0].mxu0
    %v1072 = vpop.f32.mrb[0].mxu0
    %v1073 = vadd.f32 %v537, %v1072
    %v1074 = vpop.f32.mrb[0].mxu0
    %1075 = vmatprep.mubr.bf16.mxu0 0
    %1076 = vmatmul.mubr.bf16.gmra.mrb[0].mxu0 %v509
    %v1077 = vpop.f32.mrb[0].mxu0
    %v1078 = vadd.f32 %v537, %v1077
    %v1079 = vpop.f32.mrb[0].mxu0
    %v1080 = vpop.f32.mrb[0].mxu0
    %v1081 = vadd.f32 %v537, %v1080
    %v1082 = vpop.f32.mrb[0].mxu0
    %1083 = vmatprep.mubr.bf16.mxu0 0
    %1084 = vmatmul.mubr.bf16.gmra.mrb[0].mxu0 %v510
    %v1085 = vpop.f32.mrb[0].mxu0
    %v1086 = vadd.f32 %v537, %v1085
    %v1087 = vpop.f32.mrb[0].mxu0
    %v1088 = vpop.f32.mrb[0].mxu0
    %v1089 = vadd.f32 %v537, %v1088
    %v1090 = vpop.f32.mrb[0].mxu0
    %1091 = vmatprep.mubr.bf16.mxu0 0
    %1092 = vmatmul.mubr.bf16.gmra.mrb[0].mxu0 %v511
    %v1093 = vpop.f32.mrb[0].mxu0
    %v1094 = vadd.f32 %v537, %v1093
    %v1095 = vpop.f32.mrb[0].mxu0
    %v1096 = vpop.f32.mrb[0].mxu0
    %v1097 = vadd.f32 %v537, %v1096
    %v1098 = vpop.f32.mrb[0].mxu0
    %1099 = vmatprep.mubr.bf16.mxu0 0
    %1100 = vmatmul.mubr.bf16.gmra.mrb[0].mxu0 %v512
    %v1101 = vpop.f32.mrb[0].mxu0
    %v1102 = vadd.f32 %v537, %v1101
    %v1103 = vpop.f32.mrb[0].mxu0
    %v1104 = vpop.f32.mrb[0].mxu0
    %v1105 = vadd.f32 %v537, %v1104
    %v1106 = vpop.f32.mrb[0].mxu0
    %1107 = vmatprep.mubr.bf16.mxu0 0
    %1108 = vmatmul.mubr.bf16.gmra.mrb[0].mxu0 %v513
    %v1109 = vpop.f32.mrb[0].mxu0
    %v1110 = vadd.f32 %v537, %v1109
    %v1111 = vpop.f32.mrb[0].mxu0
    %v1112 = vpop.f32.mrb[0].mxu0
    %v1113 = vadd.f32 %v537, %v1112
    %v1114 = vpop.f32.mrb[0].mxu0
    %1115 = vmatprep.mubr.bf16.mxu0 0
    %1116 = vmatmul.mubr.bf16.gmra.mrb[0].mxu0 %v514
    %v1117 = vpop.f32.mrb[0].mxu0
    %v1118 = vadd.f32 %v537, %v1117
    %v1119 = vpop.f32.mrb[0].mxu0
    %v1120 = vpop.f32.mrb[0].mxu0
    %v1121 = vadd.f32 %v537, %v1120
    %v1122 = vpop.f32.mrb[0].mxu0
    %1123 = vmatprep.mubr.bf16.mxu0 0
    %1124 = vmatmul.mubr.bf16.gmra.mrb[0].mxu0 %v515
    %v1125 = vpop.f32.mrb[0].mxu0
    %v1126 = vadd.f32 %v537, %v1125
    %v1127 = vpop.f32.mrb[0].mxu0
    %v1128 = vpop.f32.mrb[0].mxu0
    %v1129 = vadd.f32 %v537, %v1128
    %v1130 = vpop.f32.mrb[0].mxu0
    %1131 = vdwg.mxu0
    %v1132 = vmax.f32 %v622, 0.0
    %v1133 = vmax.f32 %v625, 0.0
    %v1134 = vmax.f32 %v630, 0.0
    %v1135 = vmax.f32 %v633, 0.0
    %v1136 = vmax.f32 %v638, 0.0
    %v1137 = vmax.f32 %v641, 0.0
    %v1138 = vmax.f32 %v646, 0.0
    %v1139 = vmax.f32 %v649, 0.0
    %v1140 = vmax.f32 %v654, 0.0
    %v1141 = vmax.f32 %v657, 0.0
    %v1142 = vmax.f32 %v662, 0.0
    %v1143 = vmax.f32 %v665, 0.0
    %v1144 = vmax.f32 %v670, 0.0
    %v1145 = vmax.f32 %v673, 0.0
    %v1146 = vmax.f32 %v678, 0.0
    %v1147 = vmax.f32 %v681, 0.0
    %v1148 = vmax.f32 %v686, 0.0
    %v1149 = vmax.f32 %v689, 0.0
    %v1150 = vmax.f32 %v694, 0.0
    %v1151 = vmax.f32 %v697, 0.0
    %v1152 = vmax.f32 %v702, 0.0
    %v1153 = vmax.f32 %v705, 0.0
    %v1154 = vmax.f32 %v710, 0.0
    %v1155 = vmax.f32 %v713, 0.0
    %v1156 = vmax.f32 %v718, 0.0
    %v1157 = vmax.f32 %v721, 0.0
    %v1158 = vmax.f32 %v726, 0.0
    %v1159 = vmax.f32 %v729, 0.0
    %v1160 = vmax.f32 %v734, 0.0
    %v1161 = vmax.f32 %v737, 0.0
    %v1162 = vmax.f32 %v742, 0.0
    %v1163 = vmax.f32 %v745, 0.0
    %v1164 = vmax.f32 %v750, 0.0
    %v1165 = vmax.f32 %v753, 0.0
    %v1166 = vmax.f32 %v758, 0.0
    %v1167 = vmax.f32 %v761, 0.0
    %v1168 = vmax.f32 %v766, 0.0
    %v1169 = vmax.f32 %v769, 0.0
    %v1170 = vmax.f32 %v774, 0.0
    %v1171 = vmax.f32 %v777, 0.0
    %v1172 = vmax.f32 %v782, 0.0
    %v1173 = vmax.f32 %v785, 0.0
    %v1174 = vmax.f32 %v790, 0.0
    %v1175 = vmax.f32 %v793, 0.0
    %v1176 = vmax.f32 %v798, 0.0
    %v1177 = vmax.f32 %v801, 0.0
    %v1178 = vmax.f32 %v806, 0.0
    %v1179 = vmax.f32 %v809, 0.0
    %v1180 = vmax.f32 %v814, 0.0
    %v1181 = vmax.f32 %v817, 0.0
    %v1182 = vmax.f32 %v822, 0.0
    %v1183 = vmax.f32 %v825, 0.0
    %v1184 = vmax.f32 %v830, 0.0
    %v1185 = vmax.f32 %v833, 0.0
    %v1186 = vmax.f32 %v838, 0.0
    %v1187 = vmax.f32 %v841, 0.0
    %v1188 = vmax.f32 %v846, 0.0
    %v1189 = vmax.f32 %v849, 0.0
    %v1190 = vmax.f32 %v854, 0.0
    %v1191 = vmax.f32 %v857, 0.0
    %v1192 = vmax.f32 %v862, 0.0
    %v1193 = vmax.f32 %v865, 0.0
    %v1194 = vmax.f32 %v870, 0.0
    %v1195 = vmax.f32 %v873, 0.0
    %v1196 = vmax.f32 %v878, 0.0
    %v1197 = vmax.f32 %v881, 0.0
    %v1198 = vmax.f32 %v886, 0.0
    %v1199 = vmax.f32 %v889, 0.0
    %v1200 = vmax.f32 %v894, 0.0
    %v1201 = vmax.f32 %v897, 0.0
    %v1202 = vmax.f32 %v902, 0.0
    %v1203 = vmax.f32 %v905, 0.0
    %v1204 = vmax.f32 %v910, 0.0
    %v1205 = vmax.f32 %v913, 0.0
    %v1206 = vmax.f32 %v918, 0.0
    %v1207 = vmax.f32 %v921, 0.0
    %v1208 = vmax.f32 %v926, 0.0
    %v1209 = vmax.f32 %v929, 0.0
    %v1210 = vmax.f32 %v934, 0.0
    %v1211 = vmax.f32 %v937, 0.0
    %v1212 = vmax.f32 %v942, 0.0
    %v1213 = vmax.f32 %v945, 0.0
    %v1214 = vmax.f32 %v950, 0.0
    %v1215 = vmax.f32 %v953, 0.0
    %v1216 = vmax.f32 %v958, 0.0
    %v1217 = vmax.f32 %v961, 0.0
    %v1218 = vmax.f32 %v966, 0.0
    %v1219 = vmax.f32 %v969, 0.0
    %v1220 = vmax.f32 %v974, 0.0
    %v1221 = vmax.f32 %v977, 0.0
    %v1222 = vmax.f32 %v982, 0.0
    %v1223 = vmax.f32 %v985, 0.0
    %v1224 = vmax.f32 %v990, 0.0
    %v1225 = vmax.f32 %v993, 0.0
    %v1226 = vmax.f32 %v998, 0.0
    %v1227 = vmax.f32 %v1001, 0.0
    %v1228 = vmax.f32 %v1006, 0.0
    %v1229 = vmax.f32 %v1009, 0.0
    %v1230 = vmax.f32 %v1014, 0.0
    %v1231 = vmax.f32 %v1017, 0.0
    %v1232 = vmax.f32 %v1022, 0.0
    %v1233 = vmax.f32 %v1025, 0.0
    %v1234 = vmax.f32 %v1030, 0.0
    %v1235 = vmax.f32 %v1033, 0.0
    %v1236 = vmax.f32 %v1038, 0.0
    %v1237 = vmax.f32 %v1041, 0.0
    %v1238 = vmax.f32 %v1046, 0.0
    %v1239 = vmax.f32 %v1049, 0.0
    %v1240 = vmax.f32 %v1054, 0.0
    %v1241 = vmax.f32 %v1057, 0.0
    %v1242 = vmax.f32 %v1062, 0.0
    %v1243 = vmax.f32 %v1065, 0.0
    %v1244 = vmax.f32 %v1070, 0.0
    %v1245 = vmax.f32 %v1073, 0.0
    %v1246 = vmax.f32 %v1078, 0.0
    %v1247 = vmax.f32 %v1081, 0.0
    %v1248 = vmax.f32 %v1086, 0.0
    %v1249 = vmax.f32 %v1089, 0.0
    %v1250 = vmax.f32 %v1094, 0.0
    %v1251 = vmax.f32 %v1097, 0.0
    %v1252 = vmax.f32 %v1102, 0.0
    %v1253 = vmax.f32 %v1105, 0.0
    %v1254 = vmax.f32 %v1110, 0.0
    %v1255 = vmax.f32 %v1113, 0.0
    %v1256 = vmax.f32 %v1118, 0.0
    %v1257 = vmax.f32 %v1121, 0.0
    %v1258 = vmax.f32 %v1126, 0.0
    %v1259 = vmax.f32 %v1129, 0.0
    %v1260 = vpack.c.bf16 %v1133, %v1132
    %v1261 = vpack.c.bf16 %v1135, %v1134
    %v1262 = vpack.c.bf16 %v1137, %v1136
    %v1263 = vpack.c.bf16 %v1139, %v1138
    %v1264 = vpack.c.bf16 %v1141, %v1140
    %v1265 = vpack.c.bf16 %v1143, %v1142
    %v1266 = vpack.c.bf16 %v1145, %v1144
    %v1267 = vpack.c.bf16 %v1147, %v1146
    %v1268 = vpack.c.bf16 %v1149, %v1148
    %v1269 = vpack.c.bf16 %v1151, %v1150
    %v1270 = vpack.c.bf16 %v1153, %v1152
    %v1271 = vpack.c.bf16 %v1155, %v1154
    %v1272 = vpack.c.bf16 %v1157, %v1156
    %v1273 = vpack.c.bf16 %v1159, %v1158
    %v1274 = vpack.c.bf16 %v1161, %v1160
    %v1275 = vpack.c.bf16 %v1163, %v1162
    %v1276 = vpack.c.bf16 %v1165, %v1164
    %v1277 = vpack.c.bf16 %v1167, %v1166
    %v1278 = vpack.c.bf16 %v1169, %v1168
    %v1279 = vpack.c.bf16 %v1171, %v1170
    %v1280 = vpack.c.bf16 %v1173, %v1172
    %v1281 = vpack.c.bf16 %v1175, %v1174
    %v1282 = vpack.c.bf16 %v1177, %v1176
    %v1283 = vpack.c.bf16 %v1179, %v1178
    %v1284 = vpack.c.bf16 %v1181, %v1180
    %v1285 = vpack.c.bf16 %v1183, %v1182
    %v1286 = vpack.c.bf16 %v1185, %v1184
    %v1287 = vpack.c.bf16 %v1187, %v1186
    %v1288 = vpack.c.bf16 %v1189, %v1188
    %v1289 = vpack.c.bf16 %v1191, %v1190
    %v1290 = vpack.c.bf16 %v1193, %v1192
    %v1291 = vpack.c.bf16 %v1195, %v1194
    %v1292 = vpack.c.bf16 %v1197, %v1196
    %v1293 = vpack.c.bf16 %v1199, %v1198
    %v1294 = vpack.c.bf16 %v1201, %v1200
    %v1295 = vpack.c.bf16 %v1203, %v1202
    %v1296 = vpack.c.bf16 %v1205, %v1204
    %v1297 = vpack.c.bf16 %v1207, %v1206
    %v1298 = vpack.c.bf16 %v1209, %v1208
    %v1299 = vpack.c.bf16 %v1211, %v1210
    %v1300 = vpack.c.bf16 %v1213, %v1212
    %v1301 = vpack.c.bf16 %v1215, %v1214
    %v1302 = vpack.c.bf16 %v1217, %v1216
    %v1303 = vpack.c.bf16 %v1219, %v1218
    %v1304 = vpack.c.bf16 %v1221, %v1220
    %v1305 = vpack.c.bf16 %v1223, %v1222
    %v1306 = vpack.c.bf16 %v1225, %v1224
    %v1307 = vpack.c.bf16 %v1227, %v1226
    %v1308 = vpack.c.bf16 %v1229, %v1228
    %v1309 = vpack.c.bf16 %v1231, %v1230
    %v1310 = vpack.c.bf16 %v1233, %v1232
    %v1311 = vpack.c.bf16 %v1235, %v1234
    %v1312 = vpack.c.bf16 %v1237, %v1236
    %v1313 = vpack.c.bf16 %v1239, %v1238
    %v1314 = vpack.c.bf16 %v1241, %v1240
    %v1315 = vpack.c.bf16 %v1243, %v1242
    %v1316 = vpack.c.bf16 %v1245, %v1244
    %v1317 = vpack.c.bf16 %v1247, %v1246
    %v1318 = vpack.c.bf16 %v1249, %v1248
    %v1319 = vpack.c.bf16 %v1251, %v1250
    %v1320 = vpack.c.bf16 %v1253, %v1252
    %v1321 = vpack.c.bf16 %v1255, %v1254
    %v1322 = vpack.c.bf16 %v1257, %v1256
    %v1323 = vpack.c.bf16 %v1259, %v1258
    %v1324 = vunpack.c.l.bf16 %v1260
    %v1325 = vunpack.c.h.bf16 %v1260
    %v1326 = vunpack.c.l.bf16 %v1261
    %v1327 = vunpack.c.h.bf16 %v1261
    %v1328 = vunpack.c.l.bf16 %v1262
    %v1329 = vunpack.c.h.bf16 %v1262
    %v1330 = vunpack.c.l.bf16 %v1263
    %v1331 = vunpack.c.h.bf16 %v1263
    %v1332 = vunpack.c.l.bf16 %v1264
    %v1333 = vunpack.c.h.bf16 %v1264
    %v1334 = vunpack.c.l.bf16 %v1265
    %v1335 = vunpack.c.h.bf16 %v1265
    %v1336 = vunpack.c.l.bf16 %v1266
    %v1337 = vunpack.c.h.bf16 %v1266
    %v1338 = vunpack.c.l.bf16 %v1267
    %v1339 = vunpack.c.h.bf16 %v1267
    %v1340 = vunpack.c.l.bf16 %v1268
    %v1341 = vunpack.c.h.bf16 %v1268
    %v1342 = vunpack.c.l.bf16 %v1269
    %v1343 = vunpack.c.h.bf16 %v1269
    %v1344 = vunpack.c.l.bf16 %v1270
    %v1345 = vunpack.c.h.bf16 %v1270
    %v1346 = vunpack.c.l.bf16 %v1271
    %v1347 = vunpack.c.h.bf16 %v1271
    %v1348 = vunpack.c.l.bf16 %v1272
    %v1349 = vunpack.c.h.bf16 %v1272
    %v1350 = vunpack.c.l.bf16 %v1273
    %v1351 = vunpack.c.h.bf16 %v1273
    %v1352 = vunpack.c.l.bf16 %v1274
    %v1353 = vunpack.c.h.bf16 %v1274
    %v1354 = vunpack.c.l.bf16 %v1275
    %v1355 = vunpack.c.h.bf16 %v1275
    %v1356 = vunpack.c.l.bf16 %v1276
    %v1357 = vunpack.c.h.bf16 %v1276
    %v1358 = vunpack.c.l.bf16 %v1277
    %v1359 = vunpack.c.h.bf16 %v1277
    %v1360 = vunpack.c.l.bf16 %v1278
    %v1361 = vunpack.c.h.bf16 %v1278
    %v1362 = vunpack.c.l.bf16 %v1279
    %v1363 = vunpack.c.h.bf16 %v1279
    %v1364 = vunpack.c.l.bf16 %v1280
    %v1365 = vunpack.c.h.bf16 %v1280
    %v1366 = vunpack.c.l.bf16 %v1281
    %v1367 = vunpack.c.h.bf16 %v1281
    %v1368 = vunpack.c.l.bf16 %v1282
    %v1369 = vunpack.c.h.bf16 %v1282
    %v1370 = vunpack.c.l.bf16 %v1283
    %v1371 = vunpack.c.h.bf16 %v1283
    %v1372 = vunpack.c.l.bf16 %v1284
    %v1373 = vunpack.c.h.bf16 %v1284
    %v1374 = vunpack.c.l.bf16 %v1285
    %v1375 = vunpack.c.h.bf16 %v1285
    %v1376 = vunpack.c.l.bf16 %v1286
    %v1377 = vunpack.c.h.bf16 %v1286
    %v1378 = vunpack.c.l.bf16 %v1287
    %v1379 = vunpack.c.h.bf16 %v1287
    %v1380 = vunpack.c.l.bf16 %v1288
    %v1381 = vunpack.c.h.bf16 %v1288
    %v1382 = vunpack.c.l.bf16 %v1289
    %v1383 = vunpack.c.h.bf16 %v1289
    %v1384 = vunpack.c.l.bf16 %v1290
    %v1385 = vunpack.c.h.bf16 %v1290
    %v1386 = vunpack.c.l.bf16 %v1291
    %v1387 = vunpack.c.h.bf16 %v1291
    %v1388 = vunpack.c.l.bf16 %v1292
    %v1389 = vunpack.c.h.bf16 %v1292
    %v1390 = vunpack.c.l.bf16 %v1293
    %v1391 = vunpack.c.h.bf16 %v1293
    %v1392 = vunpack.c.l.bf16 %v1294
    %v1393 = vunpack.c.h.bf16 %v1294
    %v1394 = vunpack.c.l.bf16 %v1295
    %v1395 = vunpack.c.h.bf16 %v1295
    %v1396 = vunpack.c.l.bf16 %v1296
    %v1397 = vunpack.c.h.bf16 %v1296
    %v1398 = vunpack.c.l.bf16 %v1297
    %v1399 = vunpack.c.h.bf16 %v1297
    %v1400 = vunpack.c.l.bf16 %v1298
    %v1401 = vunpack.c.h.bf16 %v1298
    %v1402 = vunpack.c.l.bf16 %v1299
    %v1403 = vunpack.c.h.bf16 %v1299
    %v1404 = vunpack.c.l.bf16 %v1300
    %v1405 = vunpack.c.h.bf16 %v1300
    %v1406 = vunpack.c.l.bf16 %v1301
    %v1407 = vunpack.c.h.bf16 %v1301
    %v1408 = vunpack.c.l.bf16 %v1302
    %v1409 = vunpack.c.h.bf16 %v1302
    %v1410 = vunpack.c.l.bf16 %v1303
    %v1411 = vunpack.c.h.bf16 %v1303
    %v1412 = vunpack.c.l.bf16 %v1304
    %v1413 = vunpack.c.h.bf16 %v1304
    %v1414 = vunpack.c.l.bf16 %v1305
    %v1415 = vunpack.c.h.bf16 %v1305
    %v1416 = vunpack.c.l.bf16 %v1306
    %v1417 = vunpack.c.h.bf16 %v1306
    %v1418 = vunpack.c.l.bf16 %v1307
    %v1419 = vunpack.c.h.bf16 %v1307
    %v1420 = vunpack.c.l.bf16 %v1308
    %v1421 = vunpack.c.h.bf16 %v1308
    %v1422 = vunpack.c.l.bf16 %v1309
    %v1423 = vunpack.c.h.bf16 %v1309
    %v1424 = vunpack.c.l.bf16 %v1310
    %v1425 = vunpack.c.h.bf16 %v1310
    %v1426 = vunpack.c.l.bf16 %v1311
    %v1427 = vunpack.c.h.bf16 %v1311
    %v1428 = vunpack.c.l.bf16 %v1312
    %v1429 = vunpack.c.h.bf16 %v1312
    %v1430 = vunpack.c.l.bf16 %v1313
    %v1431 = vunpack.c.h.bf16 %v1313
    %v1432 = vunpack.c.l.bf16 %v1314
    %v1433 = vunpack.c.h.bf16 %v1314
    %v1434 = vunpack.c.l.bf16 %v1315
    %v1435 = vunpack.c.h.bf16 %v1315
    %v1436 = vunpack.c.l.bf16 %v1316
    %v1437 = vunpack.c.h.bf16 %v1316
    %v1438 = vunpack.c.l.bf16 %v1317
    %v1439 = vunpack.c.h.bf16 %v1317
    %v1440 = vunpack.c.l.bf16 %v1318
    %v1441 = vunpack.c.h.bf16 %v1318
    %v1442 = vunpack.c.l.bf16 %v1319
    %v1443 = vunpack.c.h.bf16 %v1319
    %v1444 = vunpack.c.l.bf16 %v1320
    %v1445 = vunpack.c.h.bf16 %v1320
    %v1446 = vunpack.c.l.bf16 %v1321
    %v1447 = vunpack.c.h.bf16 %v1321
    %v1448 = vunpack.c.l.bf16 %v1322
    %v1449 = vunpack.c.h.bf16 %v1322
    %v1450 = vunpack.c.l.bf16 %v1323
    %v1451 = vunpack.c.h.bf16 %v1323
    %v1452 = vld [vmem:[#allocation11] sm:$0x1]
    %v1454 = vlaneseq
    %v1455 = vshrl.u32 %v1454, 7
    %v1456 = vsub.s32 0, %v1455
    %v1457 = vrot.slane %v1452, %v1456
    %v1459 = vmul.f32 %v1324, %v1457
    %v1460 = vmul.f32 %v1325, %v1457
    %v1461 = vmul.f32 %v1326, %v1457
    %v1462 = vmul.f32 %v1327, %v1457
    %v1463 = vmul.f32 %v1328, %v1457
    %v1464 = vmul.f32 %v1329, %v1457
    %v1465 = vmul.f32 %v1330, %v1457
    %v1466 = vmul.f32 %v1331, %v1457
    %v1467 = vmul.f32 %v1332, %v1457
    %v1468 = vmul.f32 %v1333, %v1457
    %v1469 = vmul.f32 %v1334, %v1457
    %v1470 = vmul.f32 %v1335, %v1457
    %v1471 = vmul.f32 %v1336, %v1457
    %v1472 = vmul.f32 %v1337, %v1457
    %v1473 = vmul.f32 %v1338, %v1457
    %v1474 = vmul.f32 %v1339, %v1457
    %v1475 = vmul.f32 %v1340, %v1457
    %v1476 = vmul.f32 %v1341, %v1457
    %v1477 = vmul.f32 %v1342, %v1457
    %v1478 = vmul.f32 %v1343, %v1457
    %v1479 = vmul.f32 %v1344, %v1457
    %v1480 = vmul.f32 %v1345, %v1457
    %v1481 = vmul.f32 %v1346, %v1457
    %v1482 = vmul.f32 %v1347, %v1457
    %v1483 = vmul.f32 %v1348, %v1457
    %v1484 = vmul.f32 %v1349, %v1457
    %v1485 = vmul.f32 %v1350, %v1457
    %v1486 = vmul.f32 %v1351, %v1457
    %v1487 = vmul.f32 %v1352, %v1457
    %v1488 = vmul.f32 %v1353, %v1457
    %v1489 = vmul.f32 %v1354, %v1457
    %v1490 = vmul.f32 %v1355, %v1457
    %v1491 = vmul.f32 %v1356, %v1457
    %v1492 = vmul.f32 %v1357, %v1457
    %v1493 = vmul.f32 %v1358, %v1457
    %v1494 = vmul.f32 %v1359, %v1457
    %v1495 = vmul.f32 %v1360, %v1457
    %v1496 = vmul.f32 %v1361, %v1457
    %v1497 = vmul.f32 %v1362, %v1457
    %v1498 = vmul.f32 %v1363, %v1457
    %v1499 = vmul.f32 %v1364, %v1457
    %v1500 = vmul.f32 %v1365, %v1457
    %v1501 = vmul.f32 %v1366, %v1457
    %v1502 = vmul.f32 %v1367, %v1457
    %v1503 = vmul.f32 %v1368, %v1457
    %v1504 = vmul.f32 %v1369, %v1457
    %v1505 = vmul.f32 %v1370, %v1457
    %v1506 = vmul.f32 %v1371, %v1457
    %v1507 = vmul.f32 %v1372, %v1457
    %v1508 = vmul.f32 %v1373, %v1457
    %v1509 = vmul.f32 %v1374, %v1457
    %v1510 = vmul.f32 %v1375, %v1457
    %v1511 = vmul.f32 %v1376, %v1457
    %v1512 = vmul.f32 %v1377, %v1457
    %v1513 = vmul.f32 %v1378, %v1457
    %v1514 = vmul.f32 %v1379, %v1457
    %v1515 = vmul.f32 %v1380, %v1457
    %v1516 = vmul.f32 %v1381, %v1457
    %v1517 = vmul.f32 %v1382, %v1457
    %v1518 = vmul.f32 %v1383, %v1457
    %v1519 = vmul.f32 %v1384, %v1457
    %v1520 = vmul.f32 %v1385, %v1457
    %v1521 = vmul.f32 %v1386, %v1457
    %v1522 = vmul.f32 %v1387, %v1457
    %v1523 = vmul.f32 %v1388, %v1457
    %v1524 = vmul.f32 %v1389, %v1457
    %v1525 = vmul.f32 %v1390, %v1457
    %v1526 = vmul.f32 %v1391, %v1457
    %v1527 = vmul.f32 %v1392, %v1457
    %v1528 = vmul.f32 %v1393, %v1457
    %v1529 = vmul.f32 %v1394, %v1457
    %v1530 = vmul.f32 %v1395, %v1457
    %v1531 = vmul.f32 %v1396, %v1457
    %v1532 = vmul.f32 %v1397, %v1457
    %v1533 = vmul.f32 %v1398, %v1457
    %v1534 = vmul.f32 %v1399, %v1457
    %v1535 = vmul.f32 %v1400, %v1457
    %v1536 = vmul.f32 %v1401, %v1457
    %v1537 = vmul.f32 %v1402, %v1457
    %v1538 = vmul.f32 %v1403, %v1457
    %v1539 = vmul.f32 %v1404, %v1457
    %v1540 = vmul.f32 %v1405, %v1457
    %v1541 = vmul.f32 %v1406, %v1457
    %v1542 = vmul.f32 %v1407, %v1457
    %v1543 = vmul.f32 %v1408, %v1457
    %v1544 = vmul.f32 %v1409, %v1457
    %v1545 = vmul.f32 %v1410, %v1457
    %v1546 = vmul.f32 %v1411, %v1457
    %v1547 = vmul.f32 %v1412, %v1457
    %v1548 = vmul.f32 %v1413, %v1457
    %v1549 = vmul.f32 %v1414, %v1457
    %v1550 = vmul.f32 %v1415, %v1457
    %v1551 = vmul.f32 %v1416, %v1457
    %v1552 = vmul.f32 %v1417, %v1457
    %v1553 = vmul.f32 %v1418, %v1457
    %v1554 = vmul.f32 %v1419, %v1457
    %v1555 = vmul.f32 %v1420, %v1457
    %v1556 = vmul.f32 %v1421, %v1457
    %v1557 = vmul.f32 %v1422, %v1457
    %v1558 = vmul.f32 %v1423, %v1457
    %v1559 = vmul.f32 %v1424, %v1457
    %v1560 = vmul.f32 %v1425, %v1457
    %v1561 = vmul.f32 %v1426, %v1457
    %v1562 = vmul.f32 %v1427, %v1457
    %v1563 = vmul.f32 %v1428, %v1457
    %v1564 = vmul.f32 %v1429, %v1457
    %v1565 = vmul.f32 %v1430, %v1457
    %v1566 = vmul.f32 %v1431, %v1457
    %v1567 = vmul.f32 %v1432, %v1457
    %v1568 = vmul.f32 %v1433, %v1457
    %v1569 = vmul.f32 %v1434, %v1457
    %v1570 = vmul.f32 %v1435, %v1457
    %v1571 = vmul.f32 %v1436, %v1457
    %v1572 = vmul.f32 %v1437, %v1457
    %v1573 = vmul.f32 %v1438, %v1457
    %v1574 = vmul.f32 %v1439, %v1457
    %v1575 = vmul.f32 %v1440, %v1457
    %v1576 = vmul.f32 %v1441, %v1457
    %v1577 = vmul.f32 %v1442, %v1457
    %v1578 = vmul.f32 %v1443, %v1457
    %v1579 = vmul.f32 %v1444, %v1457
    %v1580 = vmul.f32 %v1445, %v1457
    %v1581 = vmul.f32 %v1446, %v1457
    %v1582 = vmul.f32 %v1447, %v1457
    %v1583 = vmul.f32 %v1448, %v1457
    %v1584 = vmul.f32 %v1449, %v1457
    %v1585 = vmul.f32 %v1450, %v1457
    %v1586 = vmul.f32 %v1451, %v1457
    %1587 = vadd.xlane.f32.xlu0 %v1459
    %v1588 = vpop.xlane.xlu0 %1587
    %1589 = vadd.xlane.f32.xlu0 %v1460
    %v1590 = vpop.xlane.xlu0 %1589
    %1591 = vadd.xlane.f32.xlu0 %v1461
    %v1592 = vpop.xlane.xlu0 %1591
    %1593 = vadd.xlane.f32.xlu0 %v1462
    %v1594 = vpop.xlane.xlu0 %1593
    %1595 = vadd.xlane.f32.xlu0 %v1463
    %v1596 = vpop.xlane.xlu0 %1595
    %1597 = vadd.xlane.f32.xlu0 %v1464
    %v1598 = vpop.xlane.xlu0 %1597
    %1599 = vadd.xlane.f32.xlu0 %v1465
    %v1600 = vpop.xlane.xlu0 %1599
    %1601 = vadd.xlane.f32.xlu0 %v1466
    %v1602 = vpop.xlane.xlu0 %1601
    %1603 = vadd.xlane.f32.xlu0 %v1467
    %v1604 = vpop.xlane.xlu0 %1603
    %1605 = vadd.xlane.f32.xlu0 %v1468
    %v1606 = vpop.xlane.xlu0 %1605
    %1607 = vadd.xlane.f32.xlu0 %v1469
    %v1608 = vpop.xlane.xlu0 %1607
    %1609 = vadd.xlane.f32.xlu0 %v1470
    %v1610 = vpop.xlane.xlu0 %1609
    %1611 = vadd.xlane.f32.xlu0 %v1471
    %v1612 = vpop.xlane.xlu0 %1611
    %1613 = vadd.xlane.f32.xlu0 %v1472
    %v1614 = vpop.xlane.xlu0 %1613
    %1615 = vadd.xlane.f32.xlu0 %v1473
    %v1616 = vpop.xlane.xlu0 %1615
    %1617 = vadd.xlane.f32.xlu0 %v1474
    %v1618 = vpop.xlane.xlu0 %1617
    %1619 = vadd.xlane.f32.xlu0 %v1475
    %v1620 = vpop.xlane.xlu0 %1619
    %1621 = vadd.xlane.f32.xlu0 %v1476
    %v1622 = vpop.xlane.xlu0 %1621
    %1623 = vadd.xlane.f32.xlu0 %v1477
    %v1624 = vpop.xlane.xlu0 %1623
    %1625 = vadd.xlane.f32.xlu0 %v1478
    %v1626 = vpop.xlane.xlu0 %1625
    %1627 = vadd.xlane.f32.xlu0 %v1479
    %v1628 = vpop.xlane.xlu0 %1627
    %1629 = vadd.xlane.f32.xlu0 %v1480
    %v1630 = vpop.xlane.xlu0 %1629
    %1631 = vadd.xlane.f32.xlu0 %v1481
    %v1632 = vpop.xlane.xlu0 %1631
    %1633 = vadd.xlane.f32.xlu0 %v1482
    %v1634 = vpop.xlane.xlu0 %1633
    %1635 = vadd.xlane.f32.xlu0 %v1483
    %v1636 = vpop.xlane.xlu0 %1635
    %1637 = vadd.xlane.f32.xlu0 %v1484
    %v1638 = vpop.xlane.xlu0 %1637
    %1639 = vadd.xlane.f32.xlu0 %v1485
    %v1640 = vpop.xlane.xlu0 %1639
    %1641 = vadd.xlane.f32.xlu0 %v1486
    %v1642 = vpop.xlane.xlu0 %1641
    %1643 = vadd.xlane.f32.xlu0 %v1487
    %v1644 = vpop.xlane.xlu0 %1643
    %1645 = vadd.xlane.f32.xlu0 %v1488
    %v1646 = vpop.xlane.xlu0 %1645
    %1647 = vadd.xlane.f32.xlu0 %v1489
    %v1648 = vpop.xlane.xlu0 %1647
    %1649 = vadd.xlane.f32.xlu0 %v1490
    %v1650 = vpop.xlane.xlu0 %1649
    %1651 = vadd.xlane.f32.xlu0 %v1491
    %v1652 = vpop.xlane.xlu0 %1651
    %1653 = vadd.xlane.f32.xlu0 %v1492
    %v1654 = vpop.xlane.xlu0 %1653
    %1655 = vadd.xlane.f32.xlu0 %v1493
    %v1656 = vpop.xlane.xlu0 %1655
    %1657 = vadd.xlane.f32.xlu0 %v1494
    %v1658 = vpop.xlane.xlu0 %1657
    %1659 = vadd.xlane.f32.xlu0 %v1495
    %v1660 = vpop.xlane.xlu0 %1659
    %1661 = vadd.xlane.f32.xlu0 %v1496
    %v1662 = vpop.xlane.xlu0 %1661
    %1663 = vadd.xlane.f32.xlu0 %v1497
    %v1664 = vpop.xlane.xlu0 %1663
    %1665 = vadd.xlane.f32.xlu0 %v1498
    %v1666 = vpop.xlane.xlu0 %1665
    %1667 = vadd.xlane.f32.xlu0 %v1499
    %v1668 = vpop.xlane.xlu0 %1667
    %1669 = vadd.xlane.f32.xlu0 %v1500
    %v1670 = vpop.xlane.xlu0 %1669
    %1671 = vadd.xlane.f32.xlu0 %v1501
    %v1672 = vpop.xlane.xlu0 %1671
    %1673 = vadd.xlane.f32.xlu0 %v1502
    %v1674 = vpop.xlane.xlu0 %1673
    %1675 = vadd.xlane.f32.xlu0 %v1503
    %v1676 = vpop.xlane.xlu0 %1675
    %1677 = vadd.xlane.f32.xlu0 %v1504
    %v1678 = vpop.xlane.xlu0 %1677
    %1679 = vadd.xlane.f32.xlu0 %v1505
    %v1680 = vpop.xlane.xlu0 %1679
    %1681 = vadd.xlane.f32.xlu0 %v1506
    %v1682 = vpop.xlane.xlu0 %1681
    %1683 = vadd.xlane.f32.xlu0 %v1507
    %v1684 = vpop.xlane.xlu0 %1683
    %1685 = vadd.xlane.f32.xlu0 %v1508
    %v1686 = vpop.xlane.xlu0 %1685
    %1687 = vadd.xlane.f32.xlu0 %v1509
    %v1688 = vpop.xlane.xlu0 %1687
    %1689 = vadd.xlane.f32.xlu0 %v1510
    %v1690 = vpop.xlane.xlu0 %1689
    %1691 = vadd.xlane.f32.xlu0 %v1511
    %v1692 = vpop.xlane.xlu0 %1691
    %1693 = vadd.xlane.f32.xlu0 %v1512
    %v1694 = vpop.xlane.xlu0 %1693
    %1695 = vadd.xlane.f32.xlu0 %v1513
    %v1696 = vpop.xlane.xlu0 %1695
    %1697 = vadd.xlane.f32.xlu0 %v1514
    %v1698 = vpop.xlane.xlu0 %1697
    %1699 = vadd.xlane.f32.xlu0 %v1515
    %v1700 = vpop.xlane.xlu0 %1699
    %1701 = vadd.xlane.f32.xlu0 %v1516
    %v1702 = vpop.xlane.xlu0 %1701
    %1703 = vadd.xlane.f32.xlu0 %v1517
    %v1704 = vpop.xlane.xlu0 %1703
    %1705 = vadd.xlane.f32.xlu0 %v1518
    %v1706 = vpop.xlane.xlu0 %1705
    %1707 = vadd.xlane.f32.xlu0 %v1519
    %v1708 = vpop.xlane.xlu0 %1707
    %1709 = vadd.xlane.f32.xlu0 %v1520
    %v1710 = vpop.xlane.xlu0 %1709
    %1711 = vadd.xlane.f32.xlu0 %v1521
    %v1712 = vpop.xlane.xlu0 %1711
    %1713 = vadd.xlane.f32.xlu0 %v1522
    %v1714 = vpop.xlane.xlu0 %1713
    %1715 = vadd.xlane.f32.xlu0 %v1523
    %v1716 = vpop.xlane.xlu0 %1715
    %1717 = vadd.xlane.f32.xlu0 %v1524
    %v1718 = vpop.xlane.xlu0 %1717
    %1719 = vadd.xlane.f32.xlu0 %v1525
    %v1720 = vpop.xlane.xlu0 %1719
    %1721 = vadd.xlane.f32.xlu0 %v1526
    %v1722 = vpop.xlane.xlu0 %1721
    %1723 = vadd.xlane.f32.xlu0 %v1527
    %v1724 = vpop.xlane.xlu0 %1723
    %1725 = vadd.xlane.f32.xlu0 %v1528
    %v1726 = vpop.xlane.xlu0 %1725
    %1727 = vadd.xlane.f32.xlu0 %v1529
    %v1728 = vpop.xlane.xlu0 %1727
    %1729 = vadd.xlane.f32.xlu0 %v1530
    %v1730 = vpop.xlane.xlu0 %1729
    %1731 = vadd.xlane.f32.xlu0 %v1531
    %v1732 = vpop.xlane.xlu0 %1731
    %1733 = vadd.xlane.f32.xlu0 %v1532
    %v1734 = vpop.xlane.xlu0 %1733
    %1735 = vadd.xlane.f32.xlu0 %v1533
    %v1736 = vpop.xlane.xlu0 %1735
    %1737 = vadd.xlane.f32.xlu0 %v1534
    %v1738 = vpop.xlane.xlu0 %1737
    %1739 = vadd.xlane.f32.xlu0 %v1535
    %v1740 = vpop.xlane.xlu0 %1739
    %1741 = vadd.xlane.f32.xlu0 %v1536
    %v1742 = vpop.xlane.xlu0 %1741
    %1743 = vadd.xlane.f32.xlu0 %v1537
    %v1744 = vpop.xlane.xlu0 %1743
    %1745 = vadd.xlane.f32.xlu0 %v1538
    %v1746 = vpop.xlane.xlu0 %1745
    %1747 = vadd.xlane.f32.xlu0 %v1539
    %v1748 = vpop.xlane.xlu0 %1747
    %1749 = vadd.xlane.f32.xlu0 %v1540
    %v1750 = vpop.xlane.xlu0 %1749
    %1751 = vadd.xlane.f32.xlu0 %v1541
    %v1752 = vpop.xlane.xlu0 %1751
    %1753 = vadd.xlane.f32.xlu0 %v1542
    %v1754 = vpop.xlane.xlu0 %1753
    %1755 = vadd.xlane.f32.xlu0 %v1543
    %v1756 = vpop.xlane.xlu0 %1755
    %1757 = vadd.xlane.f32.xlu0 %v1544
    %v1758 = vpop.xlane.xlu0 %1757
    %1759 = vadd.xlane.f32.xlu0 %v1545
    %v1760 = vpop.xlane.xlu0 %1759
    %1761 = vadd.xlane.f32.xlu0 %v1546
    %v1762 = vpop.xlane.xlu0 %1761
    %1763 = vadd.xlane.f32.xlu0 %v1547
    %v1764 = vpop.xlane.xlu0 %1763
    %1765 = vadd.xlane.f32.xlu0 %v1548
    %v1766 = vpop.xlane.xlu0 %1765
    %1767 = vadd.xlane.f32.xlu0 %v1549
    %v1768 = vpop.xlane.xlu0 %1767
    %1769 = vadd.xlane.f32.xlu0 %v1550
    %v1770 = vpop.xlane.xlu0 %1769
    %1771 = vadd.xlane.f32.xlu0 %v1551
    %v1772 = vpop.xlane.xlu0 %1771
    %1773 = vadd.xlane.f32.xlu0 %v1552
    %v1774 = vpop.xlane.xlu0 %1773
    %1775 = vadd.xlane.f32.xlu0 %v1553
    %v1776 = vpop.xlane.xlu0 %1775
    %1777 = vadd.xlane.f32.xlu0 %v1554
    %v1778 = vpop.xlane.xlu0 %1777
    %1779 = vadd.xlane.f32.xlu0 %v1555
    %v1780 = vpop.xlane.xlu0 %1779
    %1781 = vadd.xlane.f32.xlu0 %v1556
    %v1782 = vpop.xlane.xlu0 %1781
    %1783 = vadd.xlane.f32.xlu0 %v1557
    %v1784 = vpop.xlane.xlu0 %1783
    %1785 = vadd.xlane.f32.xlu0 %v1558
    %v1786 = vpop.xlane.xlu0 %1785
    %1787 = vadd.xlane.f32.xlu0 %v1559
    %v1788 = vpop.xlane.xlu0 %1787
    %1789 = vadd.xlane.f32.xlu0 %v1560
    %v1790 = vpop.xlane.xlu0 %1789
    %1791 = vadd.xlane.f32.xlu0 %v1561
    %v1792 = vpop.xlane.xlu0 %1791
    %1793 = vadd.xlane.f32.xlu0 %v1562
    %v1794 = vpop.xlane.xlu0 %1793
    %1795 = vadd.xlane.f32.xlu0 %v1563
    %v1796 = vpop.xlane.xlu0 %1795
    %1797 = vadd.xlane.f32.xlu0 %v1564
    %v1798 = vpop.xlane.xlu0 %1797
    %1799 = vadd.xlane.f32.xlu0 %v1565
    %v1800 = vpop.xlane.xlu0 %1799
    %1801 = vadd.xlane.f32.xlu0 %v1566
    %v1802 = vpop.xlane.xlu0 %1801
    %1803 = vadd.xlane.f32.xlu0 %v1567
    %v1804 = vpop.xlane.xlu0 %1803
    %1805 = vadd.xlane.f32.xlu0 %v1568
    %v1806 = vpop.xlane.xlu0 %1805
    %1807 = vadd.xlane.f32.xlu0 %v1569
    %v1808 = vpop.xlane.xlu0 %1807
    %1809 = vadd.xlane.f32.xlu0 %v1570
    %v1810 = vpop.xlane.xlu0 %1809
    %1811 = vadd.xlane.f32.xlu0 %v1571
    %v1812 = vpop.xlane.xlu0 %1811
    %1813 = vadd.xlane.f32.xlu0 %v1572
    %v1814 = vpop.xlane.xlu0 %1813
    %1815 = vadd.xlane.f32.xlu0 %v1573
    %v1816 = vpop.xlane.xlu0 %1815
    %1817 = vadd.xlane.f32.xlu0 %v1574
    %v1818 = vpop.xlane.xlu0 %1817
    %1819 = vadd.xlane.f32.xlu0 %v1575
    %v1820 = vpop.xlane.xlu0 %1819
    %1821 = vadd.xlane.f32.xlu0 %v1576
    %v1822 = vpop.xlane.xlu0 %1821
    %1823 = vadd.xlane.f32.xlu0 %v1577
    %v1824 = vpop.xlane.xlu0 %1823
    %1825 = vadd.xlane.f32.xlu0 %v1578
    %v1826 = vpop.xlane.xlu0 %1825
    %1827 = vadd.xlane.f32.xlu0 %v1579
    %v1828 = vpop.xlane.xlu0 %1827
    %1829 = vadd.xlane.f32.xlu0 %v1580
    %v1830 = vpop.xlane.xlu0 %1829
    %1831 = vadd.xlane.f32.xlu0 %v1581
    %v1832 = vpop.xlane.xlu0 %1831
    %1833 = vadd.xlane.f32.xlu0 %v1582
    %v1834 = vpop.xlane.xlu0 %1833
    %1835 = vadd.xlane.f32.xlu0 %v1583
    %v1836 = vpop.xlane.xlu0 %1835
    %1837 = vadd.xlane.f32.xlu0 %v1584
    %v1838 = vpop.xlane.xlu0 %1837
    %1839 = vadd.xlane.f32.xlu0 %v1585
    %v1840 = vpop.xlane.xlu0 %1839
    %1841 = vadd.xlane.f32.xlu0 %v1586
    %v1842 = vpop.xlane.xlu0 %1841
    %v1843 = vld [vmem:[#allocation2] sm:$0x1]
    %v1845 = vlaneseq
    %v1846 = vshrl.u32 %v1845, 7
    %v1847 = vsub.s32 0, %v1846
    %v1848 = vrot.slane %v1843, %v1847
    %1849 = vset.pattern.permute.xlu0 0
    %1850 = vperm.xlu0 %1849, %v1848
    %v1851 = vpop.permute.xlu0 %1850
    %v1853 = vadd.f32 %v1588, %v1851
    %v1854 = vadd.f32 %v1590, %v1851
    %v1855 = vadd.f32 %v1592, %v1851
    %v1856 = vadd.f32 %v1594, %v1851
    %v1857 = vadd.f32 %v1596, %v1851
    %v1858 = vadd.f32 %v1598, %v1851
    %v1859 = vadd.f32 %v1600, %v1851
    %v1860 = vadd.f32 %v1602, %v1851
    %v1861 = vadd.f32 %v1604, %v1851
    %v1862 = vadd.f32 %v1606, %v1851
    %v1863 = vadd.f32 %v1608, %v1851
    %v1864 = vadd.f32 %v1610, %v1851
    %v1865 = vadd.f32 %v1612, %v1851
    %v1866 = vadd.f32 %v1614, %v1851
    %v1867 = vadd.f32 %v1616, %v1851
    %v1868 = vadd.f32 %v1618, %v1851
    %v1869 = vadd.f32 %v1620, %v1851
    %v1870 = vadd.f32 %v1622, %v1851
    %v1871 = vadd.f32 %v1624, %v1851
    %v1872 = vadd.f32 %v1626, %v1851
    %v1873 = vadd.f32 %v1628, %v1851
    %v1874 = vadd.f32 %v1630, %v1851
    %v1875 = vadd.f32 %v1632, %v1851
    %v1876 = vadd.f32 %v1634, %v1851
    %v1877 = vadd.f32 %v1636, %v1851
    %v1878 = vadd.f32 %v1638, %v1851
    %v1879 = vadd.f32 %v1640, %v1851
    %v1880 = vadd.f32 %v1642, %v1851
    %v1881 = vadd.f32 %v1644, %v1851
    %v1882 = vadd.f32 %v1646, %v1851
    %v1883 = vadd.f32 %v1648, %v1851
    %v1884 = vadd.f32 %v1650, %v1851
    %v1885 = vadd.f32 %v1652, %v1851
    %v1886 = vadd.f32 %v1654, %v1851
    %v1887 = vadd.f32 %v1656, %v1851
    %v1888 = vadd.f32 %v1658, %v1851
    %v1889 = vadd.f32 %v1660, %v1851
    %v1890 = vadd.f32 %v1662, %v1851
    %v1891 = vadd.f32 %v1664, %v1851
    %v1892 = vadd.f32 %v1666, %v1851
    %v1893 = vadd.f32 %v1668, %v1851
    %v1894 = vadd.f32 %v1670, %v1851
    %v1895 = vadd.f32 %v1672, %v1851
    %v1896 = vadd.f32 %v1674, %v1851
    %v1897 = vadd.f32 %v1676, %v1851
    %v1898 = vadd.f32 %v1678, %v1851
    %v1899 = vadd.f32 %v1680, %v1851
    %v1900 = vadd.f32 %v1682, %v1851
    %v1901 = vadd.f32 %v1684, %v1851
    %v1902 = vadd.f32 %v1686, %v1851
    %v1903 = vadd.f32 %v1688, %v1851
    %v1904 = vadd.f32 %v1690, %v1851
    %v1905 = vadd.f32 %v1692, %v1851
    %v1906 = vadd.f32 %v1694, %v1851
    %v1907 = vadd.f32 %v1696, %v1851
    %v1908 = vadd.f32 %v1698, %v1851
    %v1909 = vadd.f32 %v1700, %v1851
    %v1910 = vadd.f32 %v1702, %v1851
    %v1911 = vadd.f32 %v1704, %v1851
    %v1912 = vadd.f32 %v1706, %v1851
    %v1913 = vadd.f32 %v1708, %v1851
    %v1914 = vadd.f32 %v1710, %v1851
    %v1915 = vadd.f32 %v1712, %v1851
    %v1916 = vadd.f32 %v1714, %v1851
    %v1917 = vadd.f32 %v1716, %v1851
    %v1918 = vadd.f32 %v1718, %v1851
    %v1919 = vadd.f32 %v1720, %v1851
    %v1920 = vadd.f32 %v1722, %v1851
    %v1921 = vadd.f32 %v1724, %v1851
    %v1922 = vadd.f32 %v1726, %v1851
    %v1923 = vadd.f32 %v1728, %v1851
    %v1924 = vadd.f32 %v1730, %v1851
    %v1925 = vadd.f32 %v1732, %v1851
    %v1926 = vadd.f32 %v1734, %v1851
    %v1927 = vadd.f32 %v1736, %v1851
    %v1928 = vadd.f32 %v1738, %v1851
    %v1929 = vadd.f32 %v1740, %v1851
    %v1930 = vadd.f32 %v1742, %v1851
    %v1931 = vadd.f32 %v1744, %v1851
    %v1932 = vadd.f32 %v1746, %v1851
    %v1933 = vadd.f32 %v1748, %v1851
    %v1934 = vadd.f32 %v1750, %v1851
    %v1935 = vadd.f32 %v1752, %v1851
    %v1936 = vadd.f32 %v1754, %v1851
    %v1937 = vadd.f32 %v1756, %v1851
    %v1938 = vadd.f32 %v1758, %v1851
    %v1939 = vadd.f32 %v1760, %v1851
    %v1940 = vadd.f32 %v1762, %v1851
    %v1941 = vadd.f32 %v1764, %v1851
    %v1942 = vadd.f32 %v1766, %v1851
    %v1943 = vadd.f32 %v1768, %v1851
    %v1944 = vadd.f32 %v1770, %v1851
    %v1945 = vadd.f32 %v1772, %v1851
    %v1946 = vadd.f32 %v1774, %v1851
    %v1947 = vadd.f32 %v1776, %v1851
    %v1948 = vadd.f32 %v1778, %v1851
    %v1949 = vadd.f32 %v1780, %v1851
    %v1950 = vadd.f32 %v1782, %v1851
    %v1951 = vadd.f32 %v1784, %v1851
    %v1952 = vadd.f32 %v1786, %v1851
    %v1953 = vadd.f32 %v1788, %v1851
    %v1954 = vadd.f32 %v1790, %v1851
    %v1955 = vadd.f32 %v1792, %v1851
    %v1956 = vadd.f32 %v1794, %v1851
    %v1957 = vadd.f32 %v1796, %v1851
    %v1958 = vadd.f32 %v1798, %v1851
    %v1959 = vadd.f32 %v1800, %v1851
    %v1960 = vadd.f32 %v1802, %v1851
    %v1961 = vadd.f32 %v1804, %v1851
    %v1962 = vadd.f32 %v1806, %v1851
    %v1963 = vadd.f32 %v1808, %v1851
    %v1964 = vadd.f32 %v1810, %v1851
    %v1965 = vadd.f32 %v1812, %v1851
    %v1966 = vadd.f32 %v1814, %v1851
    %v1967 = vadd.f32 %v1816, %v1851
    %v1968 = vadd.f32 %v1818, %v1851
    %v1969 = vadd.f32 %v1820, %v1851
    %v1970 = vadd.f32 %v1822, %v1851
    %v1971 = vadd.f32 %v1824, %v1851
    %v1972 = vadd.f32 %v1826, %v1851
    %v1973 = vadd.f32 %v1828, %v1851
    %v1974 = vadd.f32 %v1830, %v1851
    %v1975 = vadd.f32 %v1832, %v1851
    %v1976 = vadd.f32 %v1834, %v1851
    %v1977 = vadd.f32 %v1836, %v1851
    %v1978 = vadd.f32 %v1838, %v1851
    %v1979 = vadd.f32 %v1840, %v1851
    %v1980 = vadd.f32 %v1842, %v1851
    %v2109 = vlaneseq
    %v2110 = vand.u32 %v2109, 127
    %v2111 = vlaneseq
    %v2112 = vshrl.u32 %v2111, 7
    %v2113 = vsub.s32 %v2110, %v2112
    %v2114 = vrot.slane %v1853, %v2113
    %v2115 = vadd.s32 %v2110, 4294967288
    %v2116 = vlaneseq
    %v2117 = vshrl.u32 %v2116, 7
    %v2118 = vsub.s32 %v2115, %v2117
    %v2119 = vrot.slane %v1854, %v2118
    %vm2120 = vcmask 130112
    %v2121 = vsel %vm2120, %v2119, %v2114
    %v2122 = vadd.s32 %v2110, 4294967280
    %v2123 = vlaneseq
    %v2124 = vshrl.u32 %v2123, 7
    %v2125 = vsub.s32 %v2122, %v2124
    %v2126 = vrot.slane %v1855, %v2125
    %vm2127 = vcmask 195712
    %v2128 = vsel %vm2127, %v2126, %v2121
    %v2129 = vadd.s32 %v2110, 4294967272
    %v2130 = vlaneseq
    %v2131 = vshrl.u32 %v2130, 7
    %v2132 = vsub.s32 %v2129, %v2131
    %v2133 = vrot.slane %v1856, %v2132
    %vm2134 = vcmask 261312
    %v2135 = vsel %vm2134, %v2133, %v2128
    %v2136 = vadd.s32 %v2110, 4294967264
    %v2137 = vlaneseq
    %v2138 = vshrl.u32 %v2137, 7
    %v2139 = vsub.s32 %v2136, %v2138
    %v2140 = vrot.slane %v1857, %v2139
    %vm2141 = vcmask 326912
    %v2142 = vsel %vm2141, %v2140, %v2135
    %v2143 = vadd.s32 %v2110, 4294967256
    %v2144 = vlaneseq
    %v2145 = vshrl.u32 %v2144, 7
    %v2146 = vsub.s32 %v2143, %v2145
    %v2147 = vrot.slane %v1858, %v2146
    %vm2148 = vcmask 392512
    %v2149 = vsel %vm2148, %v2147, %v2142
    %v2150 = vadd.s32 %v2110, 4294967248
    %v2151 = vlaneseq
    %v2152 = vshrl.u32 %v2151, 7
    %v2153 = vsub.s32 %v2150, %v2152
    %v2154 = vrot.slane %v1859, %v2153
    %vm2155 = vcmask 458112
    %v2156 = vsel %vm2155, %v2154, %v2149
    %v2157 = vadd.s32 %v2110, 4294967240
    %v2158 = vlaneseq
    %v2159 = vshrl.u32 %v2158, 7
    %v2160 = vsub.s32 %v2157, %v2159
    %v2161 = vrot.slane %v1860, %v2160
    %vm2162 = vcmask 523712
    %v2163 = vsel %vm2162, %v2161, %v2156
    %v2164 = vadd.s32 %v2110, 4294967232
    %v2165 = vlaneseq
    %v2166 = vshrl.u32 %v2165, 7
    %v2167 = vsub.s32 %v2164, %v2166
    %v2168 = vrot.slane %v1861, %v2167
    %vm2169 = vcmask 589312
    %v2170 = vsel %vm2169, %v2168, %v2163
    %v2171 = vadd.s32 %v2110, 4294967224
    %v2172 = vlaneseq
    %v2173 = vshrl.u32 %v2172, 7
    %v2174 = vsub.s32 %v2171, %v2173
    %v2175 = vrot.slane %v1862, %v2174
    %vm2176 = vcmask 654912
    %v2177 = vsel %vm2176, %v2175, %v2170
    %v2178 = vadd.s32 %v2110, 4294967216
    %v2179 = vlaneseq
    %v2180 = vshrl.u32 %v2179, 7
    %v2181 = vsub.s32 %v2178, %v2180
    %v2182 = vrot.slane %v1863, %v2181
    %vm2183 = vcmask 720512
    %v2184 = vsel %vm2183, %v2182, %v2177
    %v2185 = vadd.s32 %v2110, 4294967208
    %v2186 = vlaneseq
    %v2187 = vshrl.u32 %v2186, 7
    %v2188 = vsub.s32 %v2185, %v2187
    %v2189 = vrot.slane %v1864, %v2188
    %vm2190 = vcmask 786112
    %v2191 = vsel %vm2190, %v2189, %v2184
    %v2192 = vadd.s32 %v2110, 4294967200
    %v2193 = vlaneseq
    %v2194 = vshrl.u32 %v2193, 7
    %v2195 = vsub.s32 %v2192, %v2194
    %v2196 = vrot.slane %v1865, %v2195
    %vm2197 = vcmask 851712
    %v2198 = vsel %vm2197, %v2196, %v2191
    %v2199 = vadd.s32 %v2110, 4294967192
    %v2200 = vlaneseq
    %v2201 = vshrl.u32 %v2200, 7
    %v2202 = vsub.s32 %v2199, %v2201
    %v2203 = vrot.slane %v1866, %v2202
    %vm2204 = vcmask 917312
    %v2205 = vsel %vm2204, %v2203, %v2198
    %v2206 = vadd.s32 %v2110, 4294967184
    %v2207 = vlaneseq
    %v2208 = vshrl.u32 %v2207, 7
    %v2209 = vsub.s32 %v2206, %v2208
    %v2210 = vrot.slane %v1867, %v2209
    %vm2211 = vcmask 982912
    %v2212 = vsel %vm2211, %v2210, %v2205
    %v2213 = vadd.s32 %v2110, 4294967176
    %v2214 = vlaneseq
    %v2215 = vshrl.u32 %v2214, 7
    %v2216 = vsub.s32 %v2213, %v2215
    %v2217 = vrot.slane %v1868, %v2216
    %vm2218 = vcmask 1048512
    %v2219 = vsel %vm2218, %v2217, %v2212
    %v2220 = vlaneseq
    %v2221 = vshrl.u32 %v2220, 7
    %v2222 = vsub.s32 %v2110, %v2221
    %v2223 = vrot.slane %v1869, %v2222
    %v2224 = vlaneseq
    %v2225 = vshrl.u32 %v2224, 7
    %v2226 = vsub.s32 %v2115, %v2225
    %v2227 = vrot.slane %v1870, %v2226
    %v2228 = vsel %vm2120, %v2227, %v2223
    %v2229 = vlaneseq
    %v2230 = vshrl.u32 %v2229, 7
    %v2231 = vsub.s32 %v2122, %v2230
    %v2232 = vrot.slane %v1871, %v2231
    %v2233 = vsel %vm2127, %v2232, %v2228
    %v2234 = vlaneseq
    %v2235 = vshrl.u32 %v2234, 7
    %v2236 = vsub.s32 %v2129, %v2235
    %v2237 = vrot.slane %v1872, %v2236
    %v2238 = vsel %vm2134, %v2237, %v2233
    %v2239 = vlaneseq
    %v2240 = vshrl.u32 %v2239, 7
    %v2241 = vsub.s32 %v2136, %v2240
    %v2242 = vrot.slane %v1873, %v2241
    %v2243 = vsel %vm2141, %v2242, %v2238
    %v2244 = vlaneseq
    %v2245 = vshrl.u32 %v2244, 7
    %v2246 = vsub.s32 %v2143, %v2245
    %v2247 = vrot.slane %v1874, %v2246
    %v2248 = vsel %vm2148, %v2247, %v2243
    %v2249 = vlaneseq
    %v2250 = vshrl.u32 %v2249, 7
    %v2251 = vsub.s32 %v2150, %v2250
    %v2252 = vrot.slane %v1875, %v2251
    %v2253 = vsel %vm2155, %v2252, %v2248
    %v2254 = vlaneseq
    %v2255 = vshrl.u32 %v2254, 7
    %v2256 = vsub.s32 %v2157, %v2255
    %v2257 = vrot.slane %v1876, %v2256
    %v2258 = vsel %vm2162, %v2257, %v2253
    %v2259 = vlaneseq
    %v2260 = vshrl.u32 %v2259, 7
    %v2261 = vsub.s32 %v2164, %v2260
    %v2262 = vrot.slane %v1877, %v2261
    %v2263 = vsel %vm2169, %v2262, %v2258
    %v2264 = vlaneseq
    %v2265 = vshrl.u32 %v2264, 7
    %v2266 = vsub.s32 %v2171, %v2265
    %v2267 = vrot.slane %v1878, %v2266
    %v2268 = vsel %vm2176, %v2267, %v2263
    %v2269 = vlaneseq
    %v2270 = vshrl.u32 %v2269, 7
    %v2271 = vsub.s32 %v2178, %v2270
    %v2272 = vrot.slane %v1879, %v2271
    %v2273 = vsel %vm2183, %v2272, %v2268
    %v2274 = vlaneseq
    %v2275 = vshrl.u32 %v2274, 7
    %v2276 = vsub.s32 %v2185, %v2275
    %v2277 = vrot.slane %v1880, %v2276
    %v2278 = vsel %vm2190, %v2277, %v2273
    %v2279 = vlaneseq
    %v2280 = vshrl.u32 %v2279, 7
    %v2281 = vsub.s32 %v2192, %v2280
    %v2282 = vrot.slane %v1881, %v2281
    %v2283 = vsel %vm2197, %v2282, %v2278
    %v2284 = vlaneseq
    %v2285 = vshrl.u32 %v2284, 7
    %v2286 = vsub.s32 %v2199, %v2285
    %v2287 = vrot.slane %v1882, %v2286
    %v2288 = vsel %vm2204, %v2287, %v2283
    %v2289 = vlaneseq
    %v2290 = vshrl.u32 %v2289, 7
    %v2291 = vsub.s32 %v2206, %v2290
    %v2292 = vrot.slane %v1883, %v2291
    %v2293 = vsel %vm2211, %v2292, %v2288
    %v2294 = vlaneseq
    %v2295 = vshrl.u32 %v2294, 7
    %v2296 = vsub.s32 %v2213, %v2295
    %v2297 = vrot.slane %v1884, %v2296
    %v2298 = vsel %vm2218, %v2297, %v2293
    %v2299 = vlaneseq
    %v2300 = vshrl.u32 %v2299, 7
    %v2301 = vsub.s32 %v2110, %v2300
    %v2302 = vrot.slane %v1885, %v2301
    %v2303 = vlaneseq
    %v2304 = vshrl.u32 %v2303, 7
    %v2305 = vsub.s32 %v2115, %v2304
    %v2306 = vrot.slane %v1886, %v2305
    %v2307 = vsel %vm2120, %v2306, %v2302
    %v2308 = vlaneseq
    %v2309 = vshrl.u32 %v2308, 7
    %v2310 = vsub.s32 %v2122, %v2309
    %v2311 = vrot.slane %v1887, %v2310
    %v2312 = vsel %vm2127, %v2311, %v2307
    %v2313 = vlaneseq
    %v2314 = vshrl.u32 %v2313, 7
    %v2315 = vsub.s32 %v2129, %v2314
    %v2316 = vrot.slane %v1888, %v2315
    %v2317 = vsel %vm2134, %v2316, %v2312
    %v2318 = vlaneseq
    %v2319 = vshrl.u32 %v2318, 7
    %v2320 = vsub.s32 %v2136, %v2319
    %v2321 = vrot.slane %v1889, %v2320
    %v2322 = vsel %vm2141, %v2321, %v2317
    %v2323 = vlaneseq
    %v2324 = vshrl.u32 %v2323, 7
    %v2325 = vsub.s32 %v2143, %v2324
    %v2326 = vrot.slane %v1890, %v2325
    %v2327 = vsel %vm2148, %v2326, %v2322
    %v2328 = vlaneseq
    %v2329 = vshrl.u32 %v2328, 7
    %v2330 = vsub.s32 %v2150, %v2329
    %v2331 = vrot.slane %v1891, %v2330
    %v2332 = vsel %vm2155, %v2331, %v2327
    %v2333 = vlaneseq
    %v2334 = vshrl.u32 %v2333, 7
    %v2335 = vsub.s32 %v2157, %v2334
    %v2336 = vrot.slane %v1892, %v2335
    %v2337 = vsel %vm2162, %v2336, %v2332
    %v2338 = vlaneseq
    %v2339 = vshrl.u32 %v2338, 7
    %v2340 = vsub.s32 %v2164, %v2339
    %v2341 = vrot.slane %v1893, %v2340
    %v2342 = vsel %vm2169, %v2341, %v2337
    %v2343 = vlaneseq
    %v2344 = vshrl.u32 %v2343, 7
    %v2345 = vsub.s32 %v2171, %v2344
    %v2346 = vrot.slane %v1894, %v2345
    %v2347 = vsel %vm2176, %v2346, %v2342
    %v2348 = vlaneseq
    %v2349 = vshrl.u32 %v2348, 7
    %v2350 = vsub.s32 %v2178, %v2349
    %v2351 = vrot.slane %v1895, %v2350
    %v2352 = vsel %vm2183, %v2351, %v2347
    %v2353 = vlaneseq
    %v2354 = vshrl.u32 %v2353, 7
    %v2355 = vsub.s32 %v2185, %v2354
    %v2356 = vrot.slane %v1896, %v2355
    %v2357 = vsel %vm2190, %v2356, %v2352
    %v2358 = vlaneseq
    %v2359 = vshrl.u32 %v2358, 7
    %v2360 = vsub.s32 %v2192, %v2359
    %v2361 = vrot.slane %v1897, %v2360
    %v2362 = vsel %vm2197, %v2361, %v2357
    %v2363 = vlaneseq
    %v2364 = vshrl.u32 %v2363, 7
    %v2365 = vsub.s32 %v2199, %v2364
    %v2366 = vrot.slane %v1898, %v2365
    %v2367 = vsel %vm2204, %v2366, %v2362
    %v2368 = vlaneseq
    %v2369 = vshrl.u32 %v2368, 7
    %v2370 = vsub.s32 %v2206, %v2369
    %v2371 = vrot.slane %v1899, %v2370
    %v2372 = vsel %vm2211, %v2371, %v2367
    %v2373 = vlaneseq
    %v2374 = vshrl.u32 %v2373, 7
    %v2375 = vsub.s32 %v2213, %v2374
    %v2376 = vrot.slane %v1900, %v2375
    %v2377 = vsel %vm2218, %v2376, %v2372
    %v2378 = vlaneseq
    %v2379 = vshrl.u32 %v2378, 7
    %v2380 = vsub.s32 %v2110, %v2379
    %v2381 = vrot.slane %v1901, %v2380
    %v2382 = vlaneseq
    %v2383 = vshrl.u32 %v2382, 7
    %v2384 = vsub.s32 %v2115, %v2383
    %v2385 = vrot.slane %v1902, %v2384
    %v2386 = vsel %vm2120, %v2385, %v2381
    %v2387 = vlaneseq
    %v2388 = vshrl.u32 %v2387, 7
    %v2389 = vsub.s32 %v2122, %v2388
    %v2390 = vrot.slane %v1903, %v2389
    %v2391 = vsel %vm2127, %v2390, %v2386
    %v2392 = vlaneseq
    %v2393 = vshrl.u32 %v2392, 7
    %v2394 = vsub.s32 %v2129, %v2393
    %v2395 = vrot.slane %v1904, %v2394
    %v2396 = vsel %vm2134, %v2395, %v2391
    %v2397 = vlaneseq
    %v2398 = vshrl.u32 %v2397, 7
    %v2399 = vsub.s32 %v2136, %v2398
    %v2400 = vrot.slane %v1905, %v2399
    %v2401 = vsel %vm2141, %v2400, %v2396
    %v2402 = vlaneseq
    %v2403 = vshrl.u32 %v2402, 7
    %v2404 = vsub.s32 %v2143, %v2403
    %v2405 = vrot.slane %v1906, %v2404
    %v2406 = vsel %vm2148, %v2405, %v2401
    %v2407 = vlaneseq
    %v2408 = vshrl.u32 %v2407, 7
    %v2409 = vsub.s32 %v2150, %v2408
    %v2410 = vrot.slane %v1907, %v2409
    %v2411 = vsel %vm2155, %v2410, %v2406
    %v2412 = vlaneseq
    %v2413 = vshrl.u32 %v2412, 7
    %v2414 = vsub.s32 %v2157, %v2413
    %v2415 = vrot.slane %v1908, %v2414
    %v2416 = vsel %vm2162, %v2415, %v2411
    %v2417 = vlaneseq
    %v2418 = vshrl.u32 %v2417, 7
    %v2419 = vsub.s32 %v2164, %v2418
    %v2420 = vrot.slane %v1909, %v2419
    %v2421 = vsel %vm2169, %v2420, %v2416
    %v2422 = vlaneseq
    %v2423 = vshrl.u32 %v2422, 7
    %v2424 = vsub.s32 %v2171, %v2423
    %v2425 = vrot.slane %v1910, %v2424
    %v2426 = vsel %vm2176, %v2425, %v2421
    %v2427 = vlaneseq
    %v2428 = vshrl.u32 %v2427, 7
    %v2429 = vsub.s32 %v2178, %v2428
    %v2430 = vrot.slane %v1911, %v2429
    %v2431 = vsel %vm2183, %v2430, %v2426
    %v2432 = vlaneseq
    %v2433 = vshrl.u32 %v2432, 7
    %v2434 = vsub.s32 %v2185, %v2433
    %v2435 = vrot.slane %v1912, %v2434
    %v2436 = vsel %vm2190, %v2435, %v2431
    %v2437 = vlaneseq
    %v2438 = vshrl.u32 %v2437, 7
    %v2439 = vsub.s32 %v2192, %v2438
    %v2440 = vrot.slane %v1913, %v2439
    %v2441 = vsel %vm2197, %v2440, %v2436
    %v2442 = vlaneseq
    %v2443 = vshrl.u32 %v2442, 7
    %v2444 = vsub.s32 %v2199, %v2443
    %v2445 = vrot.slane %v1914, %v2444
    %v2446 = vsel %vm2204, %v2445, %v2441
    %v2447 = vlaneseq
    %v2448 = vshrl.u32 %v2447, 7
    %v2449 = vsub.s32 %v2206, %v2448
    %v2450 = vrot.slane %v1915, %v2449
    %v2451 = vsel %vm2211, %v2450, %v2446
    %v2452 = vlaneseq
    %v2453 = vshrl.u32 %v2452, 7
    %v2454 = vsub.s32 %v2213, %v2453
    %v2455 = vrot.slane %v1916, %v2454
    %v2456 = vsel %vm2218, %v2455, %v2451
    %v2457 = vlaneseq
    %v2458 = vshrl.u32 %v2457, 7
    %v2459 = vsub.s32 %v2110, %v2458
    %v2460 = vrot.slane %v1917, %v2459
    %v2461 = vlaneseq
    %v2462 = vshrl.u32 %v2461, 7
    %v2463 = vsub.s32 %v2115, %v2462
    %v2464 = vrot.slane %v1918, %v2463
    %v2465 = vsel %vm2120, %v2464, %v2460
    %v2466 = vlaneseq
    %v2467 = vshrl.u32 %v2466, 7
    %v2468 = vsub.s32 %v2122, %v2467
    %v2469 = vrot.slane %v1919, %v2468
    %v2470 = vsel %vm2127, %v2469, %v2465
    %v2471 = vlaneseq
    %v2472 = vshrl.u32 %v2471, 7
    %v2473 = vsub.s32 %v2129, %v2472
    %v2474 = vrot.slane %v1920, %v2473
    %v2475 = vsel %vm2134, %v2474, %v2470
    %v2476 = vlaneseq
    %v2477 = vshrl.u32 %v2476, 7
    %v2478 = vsub.s32 %v2136, %v2477
    %v2479 = vrot.slane %v1921, %v2478
    %v2480 = vsel %vm2141, %v2479, %v2475
    %v2481 = vlaneseq
    %v2482 = vshrl.u32 %v2481, 7
    %v2483 = vsub.s32 %v2143, %v2482
    %v2484 = vrot.slane %v1922, %v2483
    %v2485 = vsel %vm2148, %v2484, %v2480
    %v2486 = vlaneseq
    %v2487 = vshrl.u32 %v2486, 7
    %v2488 = vsub.s32 %v2150, %v2487
    %v2489 = vrot.slane %v1923, %v2488
    %v2490 = vsel %vm2155, %v2489, %v2485
    %v2491 = vlaneseq
    %v2492 = vshrl.u32 %v2491, 7
    %v2493 = vsub.s32 %v2157, %v2492
    %v2494 = vrot.slane %v1924, %v2493
    %v2495 = vsel %vm2162, %v2494, %v2490
    %v2496 = vlaneseq
    %v2497 = vshrl.u32 %v2496, 7
    %v2498 = vsub.s32 %v2164, %v2497
    %v2499 = vrot.slane %v1925, %v2498
    %v2500 = vsel %vm2169, %v2499, %v2495
    %v2501 = vlaneseq
    %v2502 = vshrl.u32 %v2501, 7
    %v2503 = vsub.s32 %v2171, %v2502
    %v2504 = vrot.slane %v1926, %v2503
    %v2505 = vsel %vm2176, %v2504, %v2500
    %v2506 = vlaneseq
    %v2507 = vshrl.u32 %v2506, 7
    %v2508 = vsub.s32 %v2178, %v2507
    %v2509 = vrot.slane %v1927, %v2508
    %v2510 = vsel %vm2183, %v2509, %v2505
    %v2511 = vlaneseq
    %v2512 = vshrl.u32 %v2511, 7
    %v2513 = vsub.s32 %v2185, %v2512
    %v2514 = vrot.slane %v1928, %v2513
    %v2515 = vsel %vm2190, %v2514, %v2510
    %v2516 = vlaneseq
    %v2517 = vshrl.u32 %v2516, 7
    %v2518 = vsub.s32 %v2192, %v2517
    %v2519 = vrot.slane %v1929, %v2518
    %v2520 = vsel %vm2197, %v2519, %v2515
    %v2521 = vlaneseq
    %v2522 = vshrl.u32 %v2521, 7
    %v2523 = vsub.s32 %v2199, %v2522
    %v2524 = vrot.slane %v1930, %v2523
    %v2525 = vsel %vm2204, %v2524, %v2520
    %v2526 = vlaneseq
    %v2527 = vshrl.u32 %v2526, 7
    %v2528 = vsub.s32 %v2206, %v2527
    %v2529 = vrot.slane %v1931, %v2528
    %v2530 = vsel %vm2211, %v2529, %v2525
    %v2531 = vlaneseq
    %v2532 = vshrl.u32 %v2531, 7
    %v2533 = vsub.s32 %v2213, %v2532
    %v2534 = vrot.slane %v1932, %v2533
    %v2535 = vsel %vm2218, %v2534, %v2530
    %v2536 = vlaneseq
    %v2537 = vshrl.u32 %v2536, 7
    %v2538 = vsub.s32 %v2110, %v2537
    %v2539 = vrot.slane %v1933, %v2538
    %v2540 = vlaneseq
    %v2541 = vshrl.u32 %v2540, 7
    %v2542 = vsub.s32 %v2115, %v2541
    %v2543 = vrot.slane %v1934, %v2542
    %v2544 = vsel %vm2120, %v2543, %v2539
    %v2545 = vlaneseq
    %v2546 = vshrl.u32 %v2545, 7
    %v2547 = vsub.s32 %v2122, %v2546
    %v2548 = vrot.slane %v1935, %v2547
    %v2549 = vsel %vm2127, %v2548, %v2544
    %v2550 = vlaneseq
    %v2551 = vshrl.u32 %v2550, 7
    %v2552 = vsub.s32 %v2129, %v2551
    %v2553 = vrot.slane %v1936, %v2552
    %v2554 = vsel %vm2134, %v2553, %v2549
    %v2555 = vlaneseq
    %v2556 = vshrl.u32 %v2555, 7
    %v2557 = vsub.s32 %v2136, %v2556
    %v2558 = vrot.slane %v1937, %v2557
    %v2559 = vsel %vm2141, %v2558, %v2554
    %v2560 = vlaneseq
    %v2561 = vshrl.u32 %v2560, 7
    %v2562 = vsub.s32 %v2143, %v2561
    %v2563 = vrot.slane %v1938, %v2562
    %v2564 = vsel %vm2148, %v2563, %v2559
    %v2565 = vlaneseq
    %v2566 = vshrl.u32 %v2565, 7
    %v2567 = vsub.s32 %v2150, %v2566
    %v2568 = vrot.slane %v1939, %v2567
    %v2569 = vsel %vm2155, %v2568, %v2564
    %v2570 = vlaneseq
    %v2571 = vshrl.u32 %v2570, 7
    %v2572 = vsub.s32 %v2157, %v2571
    %v2573 = vrot.slane %v1940, %v2572
    %v2574 = vsel %vm2162, %v2573, %v2569
    %v2575 = vlaneseq
    %v2576 = vshrl.u32 %v2575, 7
    %v2577 = vsub.s32 %v2164, %v2576
    %v2578 = vrot.slane %v1941, %v2577
    %v2579 = vsel %vm2169, %v2578, %v2574
    %v2580 = vlaneseq
    %v2581 = vshrl.u32 %v2580, 7
    %v2582 = vsub.s32 %v2171, %v2581
    %v2583 = vrot.slane %v1942, %v2582
    %v2584 = vsel %vm2176, %v2583, %v2579
    %v2585 = vlaneseq
    %v2586 = vshrl.u32 %v2585, 7
    %v2587 = vsub.s32 %v2178, %v2586
    %v2588 = vrot.slane %v1943, %v2587
    %v2589 = vsel %vm2183, %v2588, %v2584
    %v2590 = vlaneseq
    %v2591 = vshrl.u32 %v2590, 7
    %v2592 = vsub.s32 %v2185, %v2591
    %v2593 = vrot.slane %v1944, %v2592
    %v2594 = vsel %vm2190, %v2593, %v2589
    %v2595 = vlaneseq
    %v2596 = vshrl.u32 %v2595, 7
    %v2597 = vsub.s32 %v2192, %v2596
    %v2598 = vrot.slane %v1945, %v2597
    %v2599 = vsel %vm2197, %v2598, %v2594
    %v2600 = vlaneseq
    %v2601 = vshrl.u32 %v2600, 7
    %v2602 = vsub.s32 %v2199, %v2601
    %v2603 = vrot.slane %v1946, %v2602
    %v2604 = vsel %vm2204, %v2603, %v2599
    %v2605 = vlaneseq
    %v2606 = vshrl.u32 %v2605, 7
    %v2607 = vsub.s32 %v2206, %v2606
    %v2608 = vrot.slane %v1947, %v2607
    %v2609 = vsel %vm2211, %v2608, %v2604
    %v2610 = vlaneseq
    %v2611 = vshrl.u32 %v2610, 7
    %v2612 = vsub.s32 %v2213, %v2611
    %v2613 = vrot.slane %v1948, %v2612
    %v2614 = vsel %vm2218, %v2613, %v2609
    %v2615 = vlaneseq
    %v2616 = vshrl.u32 %v2615, 7
    %v2617 = vsub.s32 %v2110, %v2616
    %v2618 = vrot.slane %v1949, %v2617
    %v2619 = vlaneseq
    %v2620 = vshrl.u32 %v2619, 7
    %v2621 = vsub.s32 %v2115, %v2620
    %v2622 = vrot.slane %v1950, %v2621
    %v2623 = vsel %vm2120, %v2622, %v2618
    %v2624 = vlaneseq
    %v2625 = vshrl.u32 %v2624, 7
    %v2626 = vsub.s32 %v2122, %v2625
    %v2627 = vrot.slane %v1951, %v2626
    %v2628 = vsel %vm2127, %v2627, %v2623
    %v2629 = vlaneseq
    %v2630 = vshrl.u32 %v2629, 7
    %v2631 = vsub.s32 %v2129, %v2630
    %v2632 = vrot.slane %v1952, %v2631
    %v2633 = vsel %vm2134, %v2632, %v2628
    %v2634 = vlaneseq
    %v2635 = vshrl.u32 %v2634, 7
    %v2636 = vsub.s32 %v2136, %v2635
    %v2637 = vrot.slane %v1953, %v2636
    %v2638 = vsel %vm2141, %v2637, %v2633
    %v2639 = vlaneseq
    %v2640 = vshrl.u32 %v2639, 7
    %v2641 = vsub.s32 %v2143, %v2640
    %v2642 = vrot.slane %v1954, %v2641
    %v2643 = vsel %vm2148, %v2642, %v2638
    %v2644 = vlaneseq
    %v2645 = vshrl.u32 %v2644, 7
    %v2646 = vsub.s32 %v2150, %v2645
    %v2647 = vrot.slane %v1955, %v2646
    %v2648 = vsel %vm2155, %v2647, %v2643
    %v2649 = vlaneseq
    %v2650 = vshrl.u32 %v2649, 7
    %v2651 = vsub.s32 %v2157, %v2650
    %v2652 = vrot.slane %v1956, %v2651
    %v2653 = vsel %vm2162, %v2652, %v2648
    %v2654 = vlaneseq
    %v2655 = vshrl.u32 %v2654, 7
    %v2656 = vsub.s32 %v2164, %v2655
    %v2657 = vrot.slane %v1957, %v2656
    %v2658 = vsel %vm2169, %v2657, %v2653
    %v2659 = vlaneseq
    %v2660 = vshrl.u32 %v2659, 7
    %v2661 = vsub.s32 %v2171, %v2660
    %v2662 = vrot.slane %v1958, %v2661
    %v2663 = vsel %vm2176, %v2662, %v2658
    %v2664 = vlaneseq
    %v2665 = vshrl.u32 %v2664, 7
    %v2666 = vsub.s32 %v2178, %v2665
    %v2667 = vrot.slane %v1959, %v2666
    %v2668 = vsel %vm2183, %v2667, %v2663
    %v2669 = vlaneseq
    %v2670 = vshrl.u32 %v2669, 7
    %v2671 = vsub.s32 %v2185, %v2670
    %v2672 = vrot.slane %v1960, %v2671
    %v2673 = vsel %vm2190, %v2672, %v2668
    %v2674 = vlaneseq
    %v2675 = vshrl.u32 %v2674, 7
    %v2676 = vsub.s32 %v2192, %v2675
    %v2677 = vrot.slane %v1961, %v2676
    %v2678 = vsel %vm2197, %v2677, %v2673
    %v2679 = vlaneseq
    %v2680 = vshrl.u32 %v2679, 7
    %v2681 = vsub.s32 %v2199, %v2680
    %v2682 = vrot.slane %v1962, %v2681
    %v2683 = vsel %vm2204, %v2682, %v2678
    %v2684 = vlaneseq
    %v2685 = vshrl.u32 %v2684, 7
    %v2686 = vsub.s32 %v2206, %v2685
    %v2687 = vrot.slane %v1963, %v2686
    %v2688 = vsel %vm2211, %v2687, %v2683
    %v2689 = vlaneseq
    %v2690 = vshrl.u32 %v2689, 7
    %v2691 = vsub.s32 %v2213, %v2690
    %v2692 = vrot.slane %v1964, %v2691
    %v2693 = vsel %vm2218, %v2692, %v2688
    %v2694 = vlaneseq
    %v2695 = vshrl.u32 %v2694, 7
    %v2696 = vsub.s32 %v2110, %v2695
    %v2697 = vrot.slane %v1965, %v2696
    %v2698 = vlaneseq
    %v2699 = vshrl.u32 %v2698, 7
    %v2700 = vsub.s32 %v2115, %v2699
    %v2701 = vrot.slane %v1966, %v2700
    %v2702 = vsel %vm2120, %v2701, %v2697
    %v2703 = vlaneseq
    %v2704 = vshrl.u32 %v2703, 7
    %v2705 = vsub.s32 %v2122, %v2704
    %v2706 = vrot.slane %v1967, %v2705
    %v2707 = vsel %vm2127, %v2706, %v2702
    %v2708 = vlaneseq
    %v2709 = vshrl.u32 %v2708, 7
    %v2710 = vsub.s32 %v2129, %v2709
    %v2711 = vrot.slane %v1968, %v2710
    %v2712 = vsel %vm2134, %v2711, %v2707
    %v2713 = vlaneseq
    %v2714 = vshrl.u32 %v2713, 7
    %v2715 = vsub.s32 %v2136, %v2714
    %v2716 = vrot.slane %v1969, %v2715
    %v2717 = vsel %vm2141, %v2716, %v2712
    %v2718 = vlaneseq
    %v2719 = vshrl.u32 %v2718, 7
    %v2720 = vsub.s32 %v2143, %v2719
    %v2721 = vrot.slane %v1970, %v2720
    %v2722 = vsel %vm2148, %v2721, %v2717
    %v2723 = vlaneseq
    %v2724 = vshrl.u32 %v2723, 7
    %v2725 = vsub.s32 %v2150, %v2724
    %v2726 = vrot.slane %v1971, %v2725
    %v2727 = vsel %vm2155, %v2726, %v2722
    %v2728 = vlaneseq
    %v2729 = vshrl.u32 %v2728, 7
    %v2730 = vsub.s32 %v2157, %v2729
    %v2731 = vrot.slane %v1972, %v2730
    %v2732 = vsel %vm2162, %v2731, %v2727
    %v2733 = vlaneseq
    %v2734 = vshrl.u32 %v2733, 7
    %v2735 = vsub.s32 %v2164, %v2734
    %v2736 = vrot.slane %v1973, %v2735
    %v2737 = vsel %vm2169, %v2736, %v2732
    %v2738 = vlaneseq
    %v2739 = vshrl.u32 %v2738, 7
    %v2740 = vsub.s32 %v2171, %v2739
    %v2741 = vrot.slane %v1974, %v2740
    %v2742 = vsel %vm2176, %v2741, %v2737
    %v2743 = vlaneseq
    %v2744 = vshrl.u32 %v2743, 7
    %v2745 = vsub.s32 %v2178, %v2744
    %v2746 = vrot.slane %v1975, %v2745
    %v2747 = vsel %vm2183, %v2746, %v2742
    %v2748 = vlaneseq
    %v2749 = vshrl.u32 %v2748, 7
    %v2750 = vsub.s32 %v2185, %v2749
    %v2751 = vrot.slane %v1976, %v2750
    %v2752 = vsel %vm2190, %v2751, %v2747
    %v2753 = vlaneseq
    %v2754 = vshrl.u32 %v2753, 7
    %v2755 = vsub.s32 %v2192, %v2754
    %v2756 = vrot.slane %v1977, %v2755
    %v2757 = vsel %vm2197, %v2756, %v2752
    %v2758 = vlaneseq
    %v2759 = vshrl.u32 %v2758, 7
    %v2760 = vsub.s32 %v2199, %v2759
    %v2761 = vrot.slane %v1978, %v2760
    %v2762 = vsel %vm2204, %v2761, %v2757
    %v2763 = vlaneseq
    %v2764 = vshrl.u32 %v2763, 7
    %v2765 = vsub.s32 %v2206, %v2764
    %v2766 = vrot.slane %v1979, %v2765
    %v2767 = vsel %vm2211, %v2766, %v2762
    %v2768 = vlaneseq
    %v2769 = vshrl.u32 %v2768, 7
    %v2770 = vsub.s32 %v2213, %v2769
    %v2771 = vrot.slane %v1980, %v2770
    %v2772 = vsel %vm2218, %v2771, %v2767
    %vm2773 = vcmask 1041409
    %v2774 = vsel %vm2773, %v2298, %v2219
    %vm2775 = vcmask 1042434
    %v2776 = vsel %vm2775, %v2377, %v2774
    %vm2777 = vcmask 1043459
    %v2778 = vsel %vm2777, %v2456, %v2776
    %vm2779 = vcmask 1044484
    %v2780 = vsel %vm2779, %v2535, %v2778
    %vm2781 = vcmask 1045509
    %v2782 = vsel %vm2781, %v2614, %v2780
    %vm2783 = vcmask 1046534
    %v2784 = vsel %vm2783, %v2693, %v2782
    %vm2785 = vcmask 1047559
    %v2786 = vsel %vm2785, %v2772, %v2784
    %2788 = vst [vmem:[#allocation12] sm:$0xff] %v2786
    // Predicated region
    $region46: #{_forward_jit.1} parent=1 // pred_check
      _
    $region47: #{_forward_jit.1} parent=1 // pred_check_branch
      %2790 = sbr.rel (0) target = $region49
    $region48: #{_forward_jit.1} parent=1 // pred_region
      %s2792 = ssub.s32 128, 128
      %2793 = vsyncadd [#allocation5], %s2792
      %s2795 = sshll.u32 [#allocation12], 4
      %s2796 = int_to_ptr.vmem [resolvable:$true] %s2795
      %2798 = dma.vmem_to_hbm [thread:$0]  %s2796, 128, %s6, [#allocation5]
    $region49: #{_forward_jit.1} parent=1 // pred_fallthru
      _
    // Predicated region
    $region50: #{_forward_jit.1} parent=1 // pred_check
      _
    $region51: #{_forward_jit.1} parent=1 // pred_check_branch
      %2800 = sbr.rel (0) target = $region53
    $region52: #{_forward_jit.1} parent=1 // pred_region
      %2801 = dma.done [#allocation5], 128
    $region53: #{_forward_jit.1} parent=1 // pred_fallthru
      _
    %2802 = vsyncpa [#allocation4], 1
    %2803 = vsyncpa [#allocation7], 1
    %2804 = vsyncpa [#allocation10], 1
    %2805 = vsyncpa [#allocation5], 1

</llo_original>
